<compile_context>
chip_gen: v5e
topology: v5e:2x2
jax: 0.10.0
libtpu: 0.0.40
codegen_flags: <defaults>
</compile_context>

<pallas_src>
import functools

import jax
import jax.numpy as jnp
from jax.experimental import pallas as pl
from jax.experimental.pallas import tpu as pltpu

EPS = 1e-5
NEG_SLOPE = 0.1
LANE = 128
SUBLANE = 8


def _round_up(x, m):
    return (x + m - 1) // m * m


# --------------------------------------------------------------------------
# Kernel 1: fused conv1 (3x3/s, im2col matmul) + shortcut (1x1/s) matmul on
#           the MXU (bf16 operands, f32 acc) + partial BN stats per image.
# --------------------------------------------------------------------------
def conv1_sc_kernel(p_ref, wf_ref, y1_ref, ysc_ref, st_ref):
    # p_ref : (1, HW, 9*CI) bf16 conv1 patches of one image
    # wf_ref: (9*CI, 2*CP) bf16; [:, :CP] conv1 weight, [:, CP:] shortcut
    #         weight embedded at the centre-tap rows (shortcut == centre tap).
    # y1_ref, ysc_ref: (1, HW, CP) bf16 raw conv outputs
    # st_ref: (8, CP) f32 rows [sum(y1), ssd(y1), sum(ysc), ssd(ysc), 0, 0, 0, 0]
    hw = p_ref.shape[1]
    cp = y1_ref.shape[-1]
    yy = jnp.dot(p_ref[0], wf_ref[...], preferred_element_type=jnp.float32)
    y1 = yy[:, :cp]
    ysc = yy[:, cp:]
    # bf16 writeback (stats below come from the f32 accumulator).
    y1_ref[0] = y1.astype(y1_ref.dtype)
    ysc_ref[0] = ysc.astype(ysc_ref.dtype)
    inv = 1.0 / hw
    s1 = jnp.sum(y1, axis=0, keepdims=True)
    d1 = y1 - s1 * inv
    ss = jnp.sum(ysc, axis=0, keepdims=True)
    ds = ysc - ss * inv
    # direct row stores (no concatenated (8, CP) temp)
    st_ref[0:1, :] = s1
    st_ref[1:2, :] = jnp.sum(d1 * d1, axis=0, keepdims=True)
    st_ref[2:3, :] = ss
    st_ref[3:4, :] = jnp.sum(ds * ds, axis=0, keepdims=True)
    st_ref[4:8, :] = jnp.zeros((4, cp), jnp.float32)


# --------------------------------------------------------------------------
# Kernel 2: fused BN1-apply + LeakyReLU + in-VMEM 3x3/s1 conv2 (9 shifted
#           bf16 matmuls, f32 acc) + partial BN2 stats.  No im2col in HBM.
# --------------------------------------------------------------------------
def conv2_fused_kernel(y1_ref, s1_ref, t1_ref, w2_ref, y2_ref, st_ref, *, ho, wo):
    # y1_ref: (1, HW, CP) bf16 raw conv1 output   s1/t1: (1, CP) f32 BN1 fold
    # w2_ref: (9, CP, CP) bf16 (tap-major)        y2_ref: (1, HW, CP) bf16
    # st_ref: (8, CP) f32 rows [sum(y2), ssd(y2), 0...]
    hw = y1_ref.shape[1]
    cp = y1_ref.shape[-1]
    # BN1 apply + LeakyReLU in f32 (v5e-safe), back to bf16 for the MXU.
    h = y1_ref[0].astype(jnp.float32) * s1_ref[...] + t1_ref[...]
    h = jnp.where(h > 0, h, NEG_SLOPE * h).astype(jnp.bfloat16)
    h = h.reshape(ho, wo, cp)
    # conv2 'same' zero-padding built in VMEM via concatenation (padded
    # channels of h are exactly 0 because their folded scale/shift are 0).
    zr = jnp.zeros((1, wo, cp), jnp.bfloat16)
    zc = jnp.zeros((ho + 2, 1, cp), jnp.bfloat16)
    hp = jnp.concatenate([zr, h, zr], axis=0)
    hp = jnp.concatenate([zc, hp, zc], axis=1)          # (ho+2, wo+2, cp)
    # 3x3/s1 conv as 9 shifted matmuls accumulating in f32.
    acc = jnp.zeros((hw, cp), jnp.float32)
    for dy in range(3):
        for dx in range(3):
            win = hp[dy:dy + ho, dx:dx + wo, :].reshape(hw, cp)
            acc = acc + jnp.dot(win, w2_ref[3 * dy + dx],
                                preferred_element_type=jnp.float32)
    y2_ref[0] = acc.astype(y2_ref.dtype)
    s2 = jnp.sum(acc, axis=0, keepdims=True)
    d2 = acc - s2 * (1.0 / hw)
    st_ref[0:1, :] = s2
    st_ref[1:2, :] = jnp.sum(d2 * d2, axis=0, keepdims=True)
    st_ref[2:8, :] = jnp.zeros((6, cp), jnp.float32)


# --------------------------------------------------------------------------
# Kernel 3: apply folded BN2 + shortcut-BN, add, final LeakyReLU.
# --------------------------------------------------------------------------
def bn_add_lrelu_kernel(y2_ref, ysc_ref, s2_ref, t2_ref, ssc_ref, tsc_ref, o_ref):
    a = y2_ref[0].astype(jnp.float32) * s2_ref[...] + t2_ref[...]
    b = ysc_ref[0].astype(jnp.float32) * ssc_ref[...] + tsc_ref[...]
    y = a + b
    o_ref[0] = jnp.where(y > 0, y, NEG_SLOPE * y)


# --------------------------------------------------------------------------
# Wrapper helpers (JAX glue)
# --------------------------------------------------------------------------
def _im2col_nhwc(x, ksize, stride, pad):
    """[N,H,W,C] -> [N,Ho,Wo,k*k*C] (tap-major, channel-minor)."""
    N, H, W, C = x.shape
    Ho = (H + 2 * pad - ksize) // stride + 1
    Wo = (W + 2 * pad - ksize) // stride + 1
    xp = jnp.pad(x, ((0, 0), (pad, pad), (pad, pad), (0, 0)))
    cols = [xp[:, dy:dy + stride * Ho:stride, dx:dx + stride * Wo:stride, :]
            for dy in range(ksize) for dx in range(ksize)]
    return jnp.concatenate(cols, axis=-1), Ho, Wo


def _pad_c(v, cp):
    return jnp.pad(v, (0, cp - v.shape[0]))


def _fold_bn(sum_rows, q_rows, n_tile, gamma, beta):
    """Chan-combine per-tile (sum, sum-sq-dev) stats; fold gamma/beta into
    (scale, shift).  Avoids single-pass E[x^2]-E[x]^2 cancellation."""
    nt = sum_rows.shape[0]
    count = float(nt * n_tile)
    mean = jnp.sum(sum_rows, axis=0) / count
    tile_mean = sum_rows / float(n_tile)
    m2 = (jnp.sum(q_rows, axis=0)
          + float(n_tile) * jnp.sum((tile_mean - mean[None, :]) ** 2, axis=0))
    var = jnp.maximum(m2 / count, 0.0)                 # biased (training) var
    scale = gamma * jax.lax.rsqrt(var + EPS)
    shift = beta - mean * scale
    return scale[None, :], shift[None, :]              # (1, CP) each


def _cparams(block_bytes):
    # double-buffered working set * margin; clamp to [32 MiB, 48 MiB] so the
    # 64-MiB v7x parts keep headroom and 128-MiB parts get >= default scope.
    est = 3 * block_bytes                              # 2x buffers * 1.5 margin
    limit = int(min(48 * 1024 * 1024, max(32 * 1024 * 1024, est)))
    return pltpu.CompilerParams(dimension_semantics=("parallel",),
                                vmem_limit_bytes=limit)


# --------------------------------------------------------------------------
# Forward
# --------------------------------------------------------------------------
def res_block_forward(x_nchw, params, stride=2):
    """x_nchw: [N, Cin, H, W] f32 -> [N, Cout, Ho, Wo] f32."""
    N, Cin, H, W = x_nchw.shape
    Cout = params["g1"].shape[0]
    CI = _round_up(Cin, SUBLANE)                       # sublane-aligned K
    CP = _round_up(Cout, LANE)                         # lane-dense outputs
    f32 = jnp.float32

    # ---- glue: NCHW -> NHWC, channel pad, bf16, conv1 im2col ----
    x = jnp.transpose(x_nchw, (0, 2, 3, 1))
    x = jnp.pad(x, ((0, 0), (0, 0), (0, 0), (0, CI - Cin))).astype(jnp.bfloat16)
    p1, Ho, Wo = _im2col_nhwc(x, 3, stride, 1)
    HW = Ho * Wo
    K1 = 9 * CI
    p1 = p1.reshape(N, HW, K1)

    # ---- fused conv1 + shortcut weight [9*CI, 2*CP] (shortcut == centre tap) ----
    w1 = params["w1"].reshape(9, Cin, Cout)
    w1 = jnp.pad(w1, ((0, 0), (0, CI - Cin), (0, CP - Cout))).reshape(K1, CP)
    wsc = jnp.zeros((9, CI, CP), f32).at[4, :Cin, :Cout].set(params["wsc"])
    wf = jnp.concatenate([w1, wsc.reshape(K1, CP)], axis=1).astype(jnp.bfloat16)
    w2 = params["w2"].reshape(9, Cout, Cout)
    w2 = jnp.pad(w2, ((0, 0), (0, CP - Cout), (0, CP - Cout))).astype(jnp.bfloat16)
    gb = lambda k: _pad_c(params[k], CP)

    # ---- kernel 1: conv1 + shortcut matmul + partial BN stats ----
    y1, ysc, st1 = pl.pallas_call(
        conv1_sc_kernel,
        out_shape=(jax.ShapeDtypeStruct((N, HW, CP), jnp.bfloat16),
                   jax.ShapeDtypeStruct((N, HW, CP), jnp.bfloat16),
                   jax.ShapeDtypeStruct((N * 8, CP), f32)),
        grid=(N,),
        in_specs=[pl.BlockSpec((1, HW, K1), lambda n: (n, 0, 0)),
                  pl.BlockSpec((K1, 2 * CP), lambda n: (0, 0))],
        out_specs=(pl.BlockSpec((1, HW, CP), lambda n: (n, 0, 0)),
                   pl.BlockSpec((1, HW, CP), lambda n: (n, 0, 0)),
                   pl.BlockSpec((8, CP), lambda n: (n, 0))),
        compiler_params=_cparams(HW * K1 * 2 + K1 * 2 * CP * 2
                                 + 2 * HW * CP * 2 + 8 * CP * 4),
    )(p1, wf)

    # ---- fold BN1 / shortcut-BN stats (tiny cross-tile reduce, in XLA) ----
    st1 = st1.reshape(N, 8, CP)
    scale1, shift1 = _fold_bn(st1[:, 0], st1[:, 1], HW, gb("g1"), gb("b1"))
    scale_sc, shift_sc = _fold_bn(st1[:, 2], st1[:, 3], HW, gb("gsc"), gb("bsc"))

    # ---- kernel 2: BN1+lrelu fused into in-VMEM 3x3 conv2 + BN2 stats ----
    # (conv2 bias omitted: exactly cancelled by the training-mode BN2.)
    y2, st2 = pl.pallas_call(
        functools.partial(conv2_fused_kernel, ho=Ho, wo=Wo),
        out_shape=(jax.ShapeDtypeStruct((N, HW, CP), jnp.bfloat16),
                   jax.ShapeDtypeStruct((N * 8, CP), f32)),
        grid=(N,),
        in_specs=[pl.BlockSpec((1, HW, CP), lambda n: (n, 0, 0)),
                  pl.BlockSpec((1, CP), lambda n: (0, 0)),
                  pl.BlockSpec((1, CP), lambda n: (0, 0)),
                  pl.BlockSpec((9, CP, CP), lambda n: (0, 0, 0))],
        out_specs=(pl.BlockSpec((1, HW, CP), lambda n: (n, 0, 0)),
                   pl.BlockSpec((8, CP), lambda n: (n, 0))),
        compiler_params=_cparams(HW * CP * 2 + 9 * CP * CP * 2
                                 + (Ho + 2) * (Wo + 2) * CP * 2
                                 + HW * CP * (2 + 4) + 8 * CP * 4),
    )(y1, scale1, shift1, w2)

    st2 = st2.reshape(N, 8, CP)
    scale2, shift2 = _fold_bn(st2[:, 0], st2[:, 1], HW, gb("g2"), gb("b2"))

    # ---- kernel 3: BN2 + shortcut-BN apply, add, final LeakyReLU ----
    out = pl.pallas_call(
        bn_add_lrelu_kernel,
        out_shape=jax.ShapeDtypeStruct((N, HW, CP), f32),
        grid=(N,),
        in_specs=[pl.BlockSpec((1, HW, CP), lambda n: (n, 0, 0)),
                  pl.BlockSpec((1, HW, CP), lambda n: (n, 0, 0)),
                  pl.BlockSpec((1, CP), lambda n: (0, 0)),
                  pl.BlockSpec((1, CP), lambda n: (0, 0)),
                  pl.BlockSpec((1, CP), lambda n: (0, 0)),
                  pl.BlockSpec((1, CP), lambda n: (0, 0))],
        out_specs=pl.BlockSpec((1, HW, CP), lambda n: (n, 0, 0)),
        compiler_params=_cparams(2 * HW * CP * 2 + HW * CP * 4 + 4 * CP * 4),
    )(y2, ysc, scale2, shift2, scale_sc, shift_sc)

    out = out.reshape(N, Ho, Wo, CP)[:, :, :, :Cout]
    return jnp.transpose(out, (0, 3, 1, 2))            # back to NCHW


# --------------------------------------------------------------------------
# Params + pure-JAX f32 reference (for the numerical check the review asked for)
# --------------------------------------------------------------------------
def init_params(key, in_channels, out_channels):
    k1, k2, k3, k4 = jax.random.split(key, 4)
    # conv weights in matmul layout [kh*kw*Cin_like, Cout] (tap-major, ch-minor)
    w1 = jax.random.normal(k1, (9 * in_channels, out_channels), jnp.float32) * 0.1
    w2 = jax.random.normal(k2, (9 * out_channels, out_channels), jnp.float32) * 0.1
    wsc = jax.random.normal(k3, (in_channels, out_channels), jnp.float32) * 0.1
    c2 = jax.random.normal(k4, (out_channels,), jnp.float32) * 0.1  # conv2 bias
    ones = jnp.ones((out_channels,), jnp.float32)
    zeros = jnp.zeros((out_channels,), jnp.float32)
    return dict(w1=w1, g1=ones, b1=zeros,
                w2=w2, c2=c2, g2=ones, b2=zeros,
                wsc=wsc, gsc=ones, bsc=zeros)


def _ref_forward(x_nchw, p, stride=2):
    """f32 reference with the exact PyTorch semantics (incl. conv2 bias)."""
    x = jnp.transpose(x_nchw, (0, 2, 3, 1)).astype(jnp.float32)
    Cin = x.shape[-1]
    Cout = p["g1"].shape[0]
    dn = ("NHWC", "HWIO", "NHWC")

    def bn(y, g, b):
        m = jnp.mean(y, axis=(0, 1, 2))
        v = jnp.var(y, axis=(0, 1, 2))
        return (y - m) * jax.lax.rsqrt(v + EPS) * g + b

    lrelu = lambda y: jnp.where(y > 0, y, NEG_SLOPE * y)
    w1 = p["w1"].reshape(3, 3, Cin, Cout)
    w2 = p["w2"].reshape(3, 3, Cout, Cout)
    wsc = p["wsc"].reshape(1, 1, Cin, Cout)
    y1 = jax.lax.conv_general_dilated(x, w1, (stride, stride),
                                      ((1, 1), (1, 1)), dimension_numbers=dn)
    h = lrelu(bn(y1, p["g1"], p["b1"]))
    y2 = jax.lax.conv_general_dilated(h, w2, (1, 1),
                                      ((1, 1), (1, 1)), dimension_numbers=dn) + p["c2"]
    a = bn(y2, p["g2"], p["b2"])
    ysc = jax.lax.conv_general_dilated(x, wsc, (stride, stride),
                                       ((0, 0), (0, 0)), dimension_numbers=dn)
    b = bn(ysc, p["gsc"], p["bsc"])
    return jnp.transpose(lrelu(a + b), (0, 3, 1, 2))


if __name__ == "__main__":
    key = jax.random.PRNGKey(0)
    kx, kp = jax.random.split(key)

    N, Cin, Cout, H, W = 2, 4, 8, 16, 16
    x = jax.random.normal(kx, (N, Cin, H, W), jnp.float32)
    params = init_params(kp, Cin, Cout)

    fwd = jax.jit(lambda v: res_block_forward(v, params, stride=2))
    out = jax.block_until_ready(fwd(x))

    assert out.shape == (N, Cout, H // 2, W // 2), out.shape
    assert bool(jnp.all(jnp.isfinite(out)))

    ref = jax.block_until_ready(_ref_forward(x, params, stride=2))
    err = float(jnp.max(jnp.abs(out - ref)))
    assert err < 1e-1, f"max |pallas - reference| = {err}"
    print("KERNEL_OK")
</pallas_src>

<mosaic_0001>
module attributes {stable_mosaic.version = 11 : i64} {
  func.func @conv1_sc_kernel(%arg0: i32, %arg1: memref<1x64x72xbf16, #tpu.memory_space<vmem>>, %arg2: memref<72x256xbf16, #tpu.memory_space<vmem>>, %arg3: memref<1x64x128xbf16, #tpu.memory_space<vmem>>, %arg4: memref<1x64x128xbf16, #tpu.memory_space<vmem>>, %arg5: memref<8x128xf32, #tpu.memory_space<vmem>>) attributes {dimension_semantics = [#tpu.dimension_semantics<parallel>], iteration_bounds = array<i64: 2>, scalar_prefetch = 0 : i64, scratch_operands = 0 : i64, tpu.core_type = #tpu.core_type<tc>, window_params = [{transform_indices = @transform_0, window_bounds = array<i64: 1, 64, 72>}, {pipeline_mode = #tpu.pipeline_mode<synchronous>, transform_indices = @transform_1, window_bounds = array<i64: 72, 256>}, {transform_indices = @transform_2, window_bounds = array<i64: 1, 64, 128>}, {transform_indices = @transform_3, window_bounds = array<i64: 1, 64, 128>}, {transform_indices = @transform_4, window_bounds = array<i64: 8, 128>}]} {
    %c0 = arith.constant 0 : index
    %c0_0 = arith.constant 0 : index
    %c0_1 = arith.constant 0 : index
    %0 = vector.load %arg1[%c0, %c0_0, %c0_1] : memref<1x64x72xbf16, #tpu.memory_space<vmem>>, vector<1x64x72xbf16>
    %1 = vector.shape_cast %0 : vector<1x64x72xbf16> to vector<64x72xbf16>
    %c0_2 = arith.constant 0 : index
    %c0_3 = arith.constant 0 : index
    %2 = vector.load %arg2[%c0_2, %c0_3] : memref<72x256xbf16, #tpu.memory_space<vmem>>, vector<72x256xbf16>
    %cst = arith.constant dense<0.000000e+00> : vector<64x256xf32>
    %3 = tpu.matmul %1, %2, %cst {dimension_numbers = #tpu.dot_dimension_numbers<[1], [0], [0], [1], [0, 0, 1, 1], [], []>} : vector<64x72xbf16>, vector<72x256xbf16>, vector<64x256xf32> -> vector<64x256xf32>
    %4 = vector.extract_strided_slice %3 {offsets = [0, 0], sizes = [64, 128], strides = [1, 1]} : vector<64x256xf32> to vector<64x128xf32>
    %5 = vector.extract_strided_slice %3 {offsets = [0, 128], sizes = [64, 128], strides = [1, 1]} : vector<64x256xf32> to vector<64x128xf32>
    %6 = arith.truncf %4 : vector<64x128xf32> to vector<64x128xbf16>
    %c0_4 = arith.constant 0 : index
    %c0_5 = arith.constant 0 : index
    %c0_6 = arith.constant 0 : index
    %7 = vector.load %arg3[%c0_4, %c0_5, %c0_6] : memref<1x64x128xbf16, #tpu.memory_space<vmem>>, vector<1x64x128xbf16>
    %8 = vector.shape_cast %7 : vector<1x64x128xbf16> to vector<64x128xbf16>
    %9 = vector.shape_cast %6 : vector<64x128xbf16> to vector<1x64x128xbf16>
    tpu.vector_store %arg3[%c0_4, %c0_5, %c0_6], %9 {strides = array<i32>} : memref<1x64x128xbf16, #tpu.memory_space<vmem>>, vector<1x64x128xbf16>,
    %10 = arith.truncf %5 : vector<64x128xf32> to vector<64x128xbf16>
    %c0_7 = arith.constant 0 : index
    %c0_8 = arith.constant 0 : index
    %c0_9 = arith.constant 0 : index
    %11 = vector.load %arg4[%c0_7, %c0_8, %c0_9] : memref<1x64x128xbf16, #tpu.memory_space<vmem>>, vector<1x64x128xbf16>
    %12 = vector.shape_cast %11 : vector<1x64x128xbf16> to vector<64x128xbf16>
    %13 = vector.shape_cast %10 : vector<64x128xbf16> to vector<1x64x128xbf16>
    tpu.vector_store %arg4[%c0_7, %c0_8, %c0_9], %13 {strides = array<i32>} : memref<1x64x128xbf16, #tpu.memory_space<vmem>>, vector<1x64x128xbf16>,
    %cst_10 = arith.constant dense<0.000000e+00> : vector<128xf32>
    %14 = vector.multi_reduction <add>, %4, %cst_10 [0] : vector<64x128xf32> to vector<128xf32>
    %15 = vector.shape_cast %14 : vector<128xf32> to vector<1x128xf32>
    %cst_11 = arith.constant 1.562500e-02 : f32
    %16 = vector.broadcast %cst_11 : f32 to vector<1x128xf32>
    %17 = arith.mulf %15, %16 : vector<1x128xf32>
    %18 = vector.broadcast %17 : vector<1x128xf32> to vector<64x128xf32>
    %19 = arith.subf %4, %18 : vector<64x128xf32>
    %cst_12 = arith.constant dense<0.000000e+00> : vector<128xf32>
    %20 = vector.multi_reduction <add>, %5, %cst_12 [0] : vector<64x128xf32> to vector<128xf32>
    %21 = vector.shape_cast %20 : vector<128xf32> to vector<1x128xf32>
    %cst_13 = arith.constant 1.562500e-02 : f32
    %22 = vector.broadcast %cst_13 : f32 to vector<1x128xf32>
    %23 = arith.mulf %21, %22 : vector<1x128xf32>
    %24 = vector.broadcast %23 : vector<1x128xf32> to vector<64x128xf32>
    %25 = arith.subf %5, %24 : vector<64x128xf32>
    %c0_14 = arith.constant 0 : index
    %c0_15 = arith.constant 0 : index
    %26 = vector.load %arg5[%c0_14, %c0_15] : memref<8x128xf32, #tpu.memory_space<vmem>>, vector<1x128xf32>
    tpu.vector_store %arg5[%c0_14, %c0_15], %15 {strides = array<i32>} : memref<8x128xf32, #tpu.memory_space<vmem>>, vector<1x128xf32>,
    %27 = arith.mulf %19, %19 : vector<64x128xf32>
    %cst_16 = arith.constant dense<0.000000e+00> : vector<128xf32>
    %28 = vector.multi_reduction <add>, %27, %cst_16 [0] : vector<64x128xf32> to vector<128xf32>
    %29 = vector.shape_cast %28 : vector<128xf32> to vector<1x128xf32>
    %c1 = arith.constant 1 : index
    %c0_17 = arith.constant 0 : index
    %30 = vector.load %arg5[%c1, %c0_17] : memref<8x128xf32, #tpu.memory_space<vmem>>, vector<1x128xf32>
    tpu.vector_store %arg5[%c1, %c0_17], %29 {strides = array<i32>} : memref<8x128xf32, #tpu.memory_space<vmem>>, vector<1x128xf32>,
    %c2 = arith.constant 2 : index
    %c0_18 = arith.constant 0 : index
    %31 = vector.load %arg5[%c2, %c0_18] : memref<8x128xf32, #tpu.memory_space<vmem>>, vector<1x128xf32>
    tpu.vector_store %arg5[%c2, %c0_18], %21 {strides = array<i32>} : memref<8x128xf32, #tpu.memory_space<vmem>>, vector<1x128xf32>,
    %32 = arith.mulf %25, %25 : vector<64x128xf32>
    %cst_19 = arith.constant dense<0.000000e+00> : vector<128xf32>
    %33 = vector.multi_reduction <add>, %32, %cst_19 [0] : vector<64x128xf32> to vector<128xf32>
    %34 = vector.shape_cast %33 : vector<128xf32> to vector<1x128xf32>
    %c3 = arith.constant 3 : index
    %c0_20 = arith.constant 0 : index
    %35 = vector.load %arg5[%c3, %c0_20] : memref<8x128xf32, #tpu.memory_space<vmem>>, vector<1x128xf32>
    tpu.vector_store %arg5[%c3, %c0_20], %34 {strides = array<i32>} : memref<8x128xf32, #tpu.memory_space<vmem>>, vector<1x128xf32>,
    %cst_21 = arith.constant 0.000000e+00 : f32
    %36 = vector.broadcast %cst_21 : f32 to vector<4x128xf32>
    %c4 = arith.constant 4 : index
    %c0_22 = arith.constant 0 : index
    %37 = vector.load %arg5[%c4, %c0_22] : memref<8x128xf32, #tpu.memory_space<vmem>>, vector<4x128xf32>
    tpu.vector_store %arg5[%c4, %c0_22], %36 {strides = array<i32>} : memref<8x128xf32, #tpu.memory_space<vmem>>, vector<4x128xf32>,
    return
  }
  func.func @transform_0(%arg0: i32) -> (i32, i32, i32) {
    %c0_i32 = arith.constant 0 : i32
    %c0_i32_0 = arith.constant 0 : i32
    %c0_i32_1 = arith.constant 0 : i32
    return %arg0, %c0_i32, %c0_i32_0 : i32, i32, i32
  }
  func.func @transform_1(%arg0: i32) -> (i32, i32) {
    %c0_i32 = arith.constant 0 : i32
    %c0_i32_0 = arith.constant 0 : i32
    %c0_i32_1 = arith.constant 0 : i32
    return %c0_i32, %c0_i32_0 : i32, i32
  }
  func.func @transform_2(%arg0: i32) -> (i32, i32, i32) {
    %c0_i32 = arith.constant 0 : i32
    %c0_i32_0 = arith.constant 0 : i32
    %c0_i32_1 = arith.constant 0 : i32
    return %arg0, %c0_i32, %c0_i32_0 : i32, i32, i32
  }
  func.func @transform_3(%arg0: i32) -> (i32, i32, i32) {
    %c0_i32 = arith.constant 0 : i32
    %c0_i32_0 = arith.constant 0 : i32
    %c0_i32_1 = arith.constant 0 : i32
    return %arg0, %c0_i32, %c0_i32_0 : i32, i32, i32
  }
  func.func @transform_4(%arg0: i32) -> (i32, i32) {
    %c0_i32 = arith.constant 0 : i32
    %c0_i32_0 = arith.constant 0 : i32
    return %arg0, %c0_i32 : i32, i32
  }
}

module attributes {stable_mosaic.version = 11 : i64} {
  func.func @conv2_fused_kernel(%arg0: i32, %arg1: memref<1x64x128xbf16, #tpu.memory_space<vmem>>, %arg2: memref<1x128xf32, #tpu.memory_space<vmem>>, %arg3: memref<1x128xf32, #tpu.memory_space<vmem>>, %arg4: memref<9x128x128xbf16, #tpu.memory_space<vmem>>, %arg5: memref<1x64x128xbf16, #tpu.memory_space<vmem>>, %arg6: memref<8x128xf32, #tpu.memory_space<vmem>>) attributes {dimension_semantics = [#tpu.dimension_semantics<parallel>], iteration_bounds = array<i64: 2>, scalar_prefetch = 0 : i64, scratch_operands = 0 : i64, tpu.core_type = #tpu.core_type<tc>, window_params = [{transform_indices = @transform_0, window_bounds = array<i64: 1, 64, 128>}, {pipeline_mode = #tpu.pipeline_mode<synchronous>, transform_indices = @transform_1, window_bounds = array<i64: 1, 128>}, {pipeline_mode = #tpu.pipeline_mode<synchronous>, transform_indices = @transform_2, window_bounds = array<i64: 1, 128>}, {pipeline_mode = #tpu.pipeline_mode<synchronous>, transform_indices = @transform_3, window_bounds = array<i64: 9, 128, 128>}, {transform_indices = @transform_4, window_bounds = array<i64: 1, 64, 128>}, {transform_indices = @transform_5, window_bounds = array<i64: 8, 128>}]} {
    %c0 = arith.constant 0 : index
    %c0_0 = arith.constant 0 : index
    %c0_1 = arith.constant 0 : index
    %0 = vector.load %arg1[%c0, %c0_0, %c0_1] : memref<1x64x128xbf16, #tpu.memory_space<vmem>>, vector<1x64x128xbf16>
    %1 = vector.shape_cast %0 : vector<1x64x128xbf16> to vector<64x128xbf16>
    %2 = arith.extf %1 : vector<64x128xbf16> to vector<64x128xf32>
    %c0_2 = arith.constant 0 : index
    %c0_3 = arith.constant 0 : index
    %3 = vector.load %arg2[%c0_2, %c0_3] : memref<1x128xf32, #tpu.memory_space<vmem>>, vector<1x128xf32>
    %4 = vector.broadcast %3 : vector<1x128xf32> to vector<64x128xf32>
    %5 = arith.mulf %2, %4 : vector<64x128xf32>
    %c0_4 = arith.constant 0 : index
    %c0_5 = arith.constant 0 : index
    %6 = vector.load %arg3[%c0_4, %c0_5] : memref<1x128xf32, #tpu.memory_space<vmem>>, vector<1x128xf32>
    %7 = vector.broadcast %6 : vector<1x128xf32> to vector<64x128xf32>
    %8 = arith.addf %5, %7 : vector<64x128xf32>
    %cst = arith.constant 0.000000e+00 : f32
    %9 = vector.broadcast %cst : f32 to vector<64x128xf32>
    %10 = arith.cmpf ogt, %8, %9 : vector<64x128xf32>
    %cst_6 = arith.constant 1.000000e-01 : f32
    %11 = vector.broadcast %cst_6 : f32 to vector<64x128xf32>
    %12 = arith.mulf %11, %8 : vector<64x128xf32>
    %13 = arith.select %10, %8, %12 : vector<64x128xi1>, vector<64x128xf32>
    %14 = arith.truncf %13 : vector<64x128xf32> to vector<64x128xbf16>
    %15 = vector.shape_cast %14 : vector<64x128xbf16> to vector<8x8x128xbf16>
    %cst_7 = arith.constant 0.000000e+00 : bf16
    %16 = vector.broadcast %cst_7 : bf16 to vector<1x8x128xbf16>
    %cst_8 = arith.constant 0.000000e+00 : bf16
    %17 = vector.broadcast %cst_8 : bf16 to vector<10x1x128xbf16>
    %18 = tpu.concatenate %16, %15, %16 in 0 : vector<1x8x128xbf16>, vector<8x8x128xbf16>, vector<1x8x128xbf16> -> vector<10x8x128xbf16>
    %19 = tpu.concatenate %17, %18, %17 in 1 : vector<10x1x128xbf16>, vector<10x8x128xbf16>, vector<10x1x128xbf16> -> vector<10x10x128xbf16>
    %cst_9 = arith.constant 0.000000e+00 : f32
    %20 = vector.broadcast %cst_9 : f32 to vector<64x128xf32>
    %21 = vector.extract_strided_slice %19 {offsets = [0, 0, 0], sizes = [8, 8, 128], strides = [1, 1, 1]} : vector<10x10x128xbf16> to vector<8x8x128xbf16>
    %22 = vector.shape_cast %21 : vector<8x8x128xbf16> to vector<64x128xbf16>
    %c0_10 = arith.constant 0 : index
    %c0_11 = arith.constant 0 : index
    %c0_12 = arith.constant 0 : index
    %23 = vector.load %arg4[%c0_10, %c0_11, %c0_12] : memref<9x128x128xbf16, #tpu.memory_space<vmem>>, vector<1x128x128xbf16>
    %24 = vector.shape_cast %23 : vector<1x128x128xbf16> to vector<128x128xbf16>
    %cst_13 = arith.constant dense<0.000000e+00> : vector<64x128xf32>
    %25 = tpu.matmul %22, %24, %cst_13 {dimension_numbers = #tpu.dot_dimension_numbers<[1], [0], [0], [1], [0, 0, 1, 1], [], []>} : vector<64x128xbf16>, vector<128x128xbf16>, vector<64x128xf32> -> vector<64x128xf32>
    %26 = arith.addf %20, %25 : vector<64x128xf32>
    %27 = vector.extract_strided_slice %19 {offsets = [0, 1, 0], sizes = [8, 8, 128], strides = [1, 1, 1]} : vector<10x10x128xbf16> to vector<8x8x128xbf16>
    %28 = vector.shape_cast %27 : vector<8x8x128xbf16> to vector<64x128xbf16>
    %c1 = arith.constant 1 : index
    %c0_14 = arith.constant 0 : index
    %c0_15 = arith.constant 0 : index
    %29 = vector.load %arg4[%c1, %c0_14, %c0_15] : memref<9x128x128xbf16, #tpu.memory_space<vmem>>, vector<1x128x128xbf16>
    %30 = vector.shape_cast %29 : vector<1x128x128xbf16> to vector<128x128xbf16>
    %cst_16 = arith.constant dense<0.000000e+00> : vector<64x128xf32>
    %31 = tpu.matmul %28, %30, %cst_16 {dimension_numbers = #tpu.dot_dimension_numbers<[1], [0], [0], [1], [0, 0, 1, 1], [], []>} : vector<64x128xbf16>, vector<128x128xbf16>, vector<64x128xf32> -> vector<64x128xf32>
    %32 = arith.addf %26, %31 : vector<64x128xf32>
    %33 = vector.extract_strided_slice %19 {offsets = [0, 2, 0], sizes = [8, 8, 128], strides = [1, 1, 1]} : vector<10x10x128xbf16> to vector<8x8x128xbf16>
    %34 = vector.shape_cast %33 : vector<8x8x128xbf16> to vector<64x128xbf16>
    %c2 = arith.constant 2 : index
    %c0_17 = arith.constant 0 : index
    %c0_18 = arith.constant 0 : index
    %35 = vector.load %arg4[%c2, %c0_17, %c0_18] : memref<9x128x128xbf16, #tpu.memory_space<vmem>>, vector<1x128x128xbf16>
    %36 = vector.shape_cast %35 : vector<1x128x128xbf16> to vector<128x128xbf16>
    %cst_19 = arith.constant dense<0.000000e+00> : vector<64x128xf32>
    %37 = tpu.matmul %34, %36, %cst_19 {dimension_numbers = #tpu.dot_dimension_numbers<[1], [0], [0], [1], [0, 0, 1, 1], [], []>} : vector<64x128xbf16>, vector<128x128xbf16>, vector<64x128xf32> -> vector<64x128xf32>
    %38 = arith.addf %32, %37 : vector<64x128xf32>
    %39 = vector.extract_strided_slice %19 {offsets = [1, 0, 0], sizes = [8, 8, 128], strides = [1, 1, 1]} : vector<10x10x128xbf16> to vector<8x8x128xbf16>
    %40 = vector.shape_cast %39 : vector<8x8x128xbf16> to vector<64x128xbf16>
    %c3 = arith.constant 3 : index
    %c0_20 = arith.constant 0 : index
    %c0_21 = arith.constant 0 : index
    %41 = vector.load %arg4[%c3, %c0_20, %c0_21] : memref<9x128x128xbf16, #tpu.memory_space<vmem>>, vector<1x128x128xbf16>
    %42 = vector.shape_cast %41 : vector<1x128x128xbf16> to vector<128x128xbf16>
    %cst_22 = arith.constant dense<0.000000e+00> : vector<64x128xf32>
    %43 = tpu.matmul %40, %42, %cst_22 {dimension_numbers = #tpu.dot_dimension_numbers<[1], [0], [0], [1], [0, 0, 1, 1], [], []>} : vector<64x128xbf16>, vector<128x128xbf16>, vector<64x128xf32> -> vector<64x128xf32>
    %44 = arith.addf %38, %43 : vector<64x128xf32>
    %45 = vector.extract_strided_slice %19 {offsets = [1, 1, 0], sizes = [8, 8, 128], strides = [1, 1, 1]} : vector<10x10x128xbf16> to vector<8x8x128xbf16>
    %46 = vector.shape_cast %45 : vector<8x8x128xbf16> to vector<64x128xbf16>
    %c4 = arith.constant 4 : index
    %c0_23 = arith.constant 0 : index
    %c0_24 = arith.constant 0 : index
    %47 = vector.load %arg4[%c4, %c0_23, %c0_24] : memref<9x128x128xbf16, #tpu.memory_space<vmem>>, vector<1x128x128xbf16>
    %48 = vector.shape_cast %47 : vector<1x128x128xbf16> to vector<128x128xbf16>
    %cst_25 = arith.constant dense<0.000000e+00> : vector<64x128xf32>
    %49 = tpu.matmul %46, %48, %cst_25 {dimension_numbers = #tpu.dot_dimension_numbers<[1], [0], [0], [1], [0, 0, 1, 1], [], []>} : vector<64x128xbf16>, vector<128x128xbf16>, vector<64x128xf32> -> vector<64x128xf32>
    %50 = arith.addf %44, %49 : vector<64x128xf32>
    %51 = vector.extract_strided_slice %19 {offsets = [1, 2, 0], sizes = [8, 8, 128], strides = [1, 1, 1]} : vector<10x10x128xbf16> to vector<8x8x128xbf16>
    %52 = vector.shape_cast %51 : vector<8x8x128xbf16> to vector<64x128xbf16>
    %c5 = arith.constant 5 : index
    %c0_26 = arith.constant 0 : index
    %c0_27 = arith.constant 0 : index
    %53 = vector.load %arg4[%c5, %c0_26, %c0_27] : memref<9x128x128xbf16, #tpu.memory_space<vmem>>, vector<1x128x128xbf16>
    %54 = vector.shape_cast %53 : vector<1x128x128xbf16> to vector<128x128xbf16>
    %cst_28 = arith.constant dense<0.000000e+00> : vector<64x128xf32>
    %55 = tpu.matmul %52, %54, %cst_28 {dimension_numbers = #tpu.dot_dimension_numbers<[1], [0], [0], [1], [0, 0, 1, 1], [], []>} : vector<64x128xbf16>, vector<128x128xbf16>, vector<64x128xf32> -> vector<64x128xf32>
    %56 = arith.addf %50, %55 : vector<64x128xf32>
    %57 = vector.extract_strided_slice %19 {offsets = [2, 0, 0], sizes = [8, 8, 128], strides = [1, 1, 1]} : vector<10x10x128xbf16> to vector<8x8x128xbf16>
    %58 = vector.shape_cast %57 : vector<8x8x128xbf16> to vector<64x128xbf16>
    %c6 = arith.constant 6 : index
    %c0_29 = arith.constant 0 : index
    %c0_30 = arith.constant 0 : index
    %59 = vector.load %arg4[%c6, %c0_29, %c0_30] : memref<9x128x128xbf16, #tpu.memory_space<vmem>>, vector<1x128x128xbf16>
    %60 = vector.shape_cast %59 : vector<1x128x128xbf16> to vector<128x128xbf16>
    %cst_31 = arith.constant dense<0.000000e+00> : vector<64x128xf32>
    %61 = tpu.matmul %58, %60, %cst_31 {dimension_numbers = #tpu.dot_dimension_numbers<[1], [0], [0], [1], [0, 0, 1, 1], [], []>} : vector<64x128xbf16>, vector<128x128xbf16>, vector<64x128xf32> -> vector<64x128xf32>
    %62 = arith.addf %56, %61 : vector<64x128xf32>
    %63 = vector.extract_strided_slice %19 {offsets = [2, 1, 0], sizes = [8, 8, 128], strides = [1, 1, 1]} : vector<10x10x128xbf16> to vector<8x8x128xbf16>
    %64 = vector.shape_cast %63 : vector<8x8x128xbf16> to vector<64x128xbf16>
    %c7 = arith.constant 7 : index
    %c0_32 = arith.constant 0 : index
    %c0_33 = arith.constant 0 : index
    %65 = vector.load %arg4[%c7, %c0_32, %c0_33] : memref<9x128x128xbf16, #tpu.memory_space<vmem>>, vector<1x128x128xbf16>
    %66 = vector.shape_cast %65 : vector<1x128x128xbf16> to vector<128x128xbf16>
    %cst_34 = arith.constant dense<0.000000e+00> : vector<64x128xf32>
    %67 = tpu.matmul %64, %66, %cst_34 {dimension_numbers = #tpu.dot_dimension_numbers<[1], [0], [0], [1], [0, 0, 1, 1], [], []>} : vector<64x128xbf16>, vector<128x128xbf16>, vector<64x128xf32> -> vector<64x128xf32>
    %68 = arith.addf %62, %67 : vector<64x128xf32>
    %69 = vector.extract_strided_slice %19 {offsets = [2, 2, 0], sizes = [8, 8, 128], strides = [1, 1, 1]} : vector<10x10x128xbf16> to vector<8x8x128xbf16>
    %70 = vector.shape_cast %69 : vector<8x8x128xbf16> to vector<64x128xbf16>
    %c8 = arith.constant 8 : index
    %c0_35 = arith.constant 0 : index
    %c0_36 = arith.constant 0 : index
    %71 = vector.load %arg4[%c8, %c0_35, %c0_36] : memref<9x128x128xbf16, #tpu.memory_space<vmem>>, vector<1x128x128xbf16>
    %72 = vector.shape_cast %71 : vector<1x128x128xbf16> to vector<128x128xbf16>
    %cst_37 = arith.constant dense<0.000000e+00> : vector<64x128xf32>
    %73 = tpu.matmul %70, %72, %cst_37 {dimension_numbers = #tpu.dot_dimension_numbers<[1], [0], [0], [1], [0, 0, 1, 1], [], []>} : vector<64x128xbf16>, vector<128x128xbf16>, vector<64x128xf32> -> vector<64x128xf32>
    %74 = arith.addf %68, %73 : vector<64x128xf32>
    %75 = arith.truncf %74 : vector<64x128xf32> to vector<64x128xbf16>
    %c0_38 = arith.constant 0 : index
    %c0_39 = arith.constant 0 : index
    %c0_40 = arith.constant 0 : index
    %76 = vector.load %arg5[%c0_38, %c0_39, %c0_40] : memref<1x64x128xbf16, #tpu.memory_space<vmem>>, vector<1x64x128xbf16>
    %77 = vector.shape_cast %76 : vector<1x64x128xbf16> to vector<64x128xbf16>
    %78 = vector.shape_cast %75 : vector<64x128xbf16> to vector<1x64x128xbf16>
    tpu.vector_store %arg5[%c0_38, %c0_39, %c0_40], %78 {strides = array<i32>} : memref<1x64x128xbf16, #tpu.memory_space<vmem>>, vector<1x64x128xbf16>,
    %cst_41 = arith.constant dense<0.000000e+00> : vector<128xf32>
    %79 = vector.multi_reduction <add>, %74, %cst_41 [0] : vector<64x128xf32> to vector<128xf32>
    %80 = vector.shape_cast %79 : vector<128xf32> to vector<1x128xf32>
    %cst_42 = arith.constant 1.562500e-02 : f32
    %81 = vector.broadcast %cst_42 : f32 to vector<1x128xf32>
    %82 = arith.mulf %80, %81 : vector<1x128xf32>
    %83 = vector.broadcast %82 : vector<1x128xf32> to vector<64x128xf32>
    %84 = arith.subf %74, %83 : vector<64x128xf32>
    %c0_43 = arith.constant 0 : index
    %c0_44 = arith.constant 0 : index
    %85 = vector.load %arg6[%c0_43, %c0_44] : memref<8x128xf32, #tpu.memory_space<vmem>>, vector<1x128xf32>
    tpu.vector_store %arg6[%c0_43, %c0_44], %80 {strides = array<i32>} : memref<8x128xf32, #tpu.memory_space<vmem>>, vector<1x128xf32>,
    %86 = arith.mulf %84, %84 : vector<64x128xf32>
    %cst_45 = arith.constant dense<0.000000e+00> : vector<128xf32>
    %87 = vector.multi_reduction <add>, %86, %cst_45 [0] : vector<64x128xf32> to vector<128xf32>
    %88 = vector.shape_cast %87 : vector<128xf32> to vector<1x128xf32>
    %c1_46 = arith.constant 1 : index
    %c0_47 = arith.constant 0 : index
    %89 = vector.load %arg6[%c1_46, %c0_47] : memref<8x128xf32, #tpu.memory_space<vmem>>, vector<1x128xf32>
    tpu.vector_store %arg6[%c1_46, %c0_47], %88 {strides = array<i32>} : memref<8x128xf32, #tpu.memory_space<vmem>>, vector<1x128xf32>,
    %cst_48 = arith.constant 0.000000e+00 : f32
    %90 = vector.broadcast %cst_48 : f32 to vector<6x128xf32>
    %c2_49 = arith.constant 2 : index
    %c0_50 = arith.constant 0 : index
    %91 = vector.load %arg6[%c2_49, %c0_50] : memref<8x128xf32, #tpu.memory_space<vmem>>, vector<6x128xf32>
    tpu.vector_store %arg6[%c2_49, %c0_50], %90 {strides = array<i32>} : memref<8x128xf32, #tpu.memory_space<vmem>>, vector<6x128xf32>,
    return
  }
  func.func @transform_0(%arg0: i32) -> (i32, i32, i32) {
    %c0_i32 = arith.constant 0 : i32
    %c0_i32_0 = arith.constant 0 : i32
    %c0_i32_1 = arith.constant 0 : i32
    return %arg0, %c0_i32, %c0_i32_0 : i32, i32, i32
  }
  func.func @transform_1(%arg0: i32) -> (i32, i32) {
    %c0_i32 = arith.constant 0 : i32
    %c0_i32_0 = arith.constant 0 : i32
    %c0_i32_1 = arith.constant 0 : i32
    return %c0_i32, %c0_i32_0 : i32, i32
  }
  func.func @transform_2(%arg0: i32) -> (i32, i32) {
    %c0_i32 = arith.constant 0 : i32
    %c0_i32_0 = arith.constant 0 : i32
    %c0_i32_1 = arith.constant 0 : i32
    return %c0_i32, %c0_i32_0 : i32, i32
  }
  func.func @transform_3(%arg0: i32) -> (i32, i32, i32) {
    %c0_i32 = arith.constant 0 : i32
    %c0_i32_0 = arith.constant 0 : i32
    %c0_i32_1 = arith.constant 0 : i32
    %c0_i32_2 = arith.constant 0 : i32
    return %c0_i32, %c0_i32_0, %c0_i32_1 : i32, i32, i32
  }
  func.func @transform_4(%arg0: i32) -> (i32, i32, i32) {
    %c0_i32 = arith.constant 0 : i32
    %c0_i32_0 = arith.constant 0 : i32
    %c0_i32_1 = arith.constant 0 : i32
    return %arg0, %c0_i32, %c0_i32_0 : i32, i32, i32
  }
  func.func @transform_5(%arg0: i32) -> (i32, i32) {
    %c0_i32 = arith.constant 0 : i32
    %c0_i32_0 = arith.constant 0 : i32
    return %arg0, %c0_i32 : i32, i32
  }
}

module attributes {stable_mosaic.version = 11 : i64} {
  func.func @bn_add_lrelu_kernel(%arg0: i32, %arg1: memref<1x64x128xbf16, #tpu.memory_space<vmem>>, %arg2: memref<1x64x128xbf16, #tpu.memory_space<vmem>>, %arg3: memref<1x128xf32, #tpu.memory_space<vmem>>, %arg4: memref<1x128xf32, #tpu.memory_space<vmem>>, %arg5: memref<1x128xf32, #tpu.memory_space<vmem>>, %arg6: memref<1x128xf32, #tpu.memory_space<vmem>>, %arg7: memref<1x64x128xf32, #tpu.memory_space<vmem>>) attributes {dimension_semantics = [#tpu.dimension_semantics<parallel>], iteration_bounds = array<i64: 2>, scalar_prefetch = 0 : i64, scratch_operands = 0 : i64, tpu.core_type = #tpu.core_type<tc>, window_params = [{transform_indices = @transform_0, window_bounds = array<i64: 1, 64, 128>}, {transform_indices = @transform_1, window_bounds = array<i64: 1, 64, 128>}, {pipeline_mode = #tpu.pipeline_mode<synchronous>, transform_indices = @transform_2, window_bounds = array<i64: 1, 128>}, {pipeline_mode = #tpu.pipeline_mode<synchronous>, transform_indices = @transform_3, window_bounds = array<i64: 1, 128>}, {pipeline_mode = #tpu.pipeline_mode<synchronous>, transform_indices = @transform_4, window_bounds = array<i64: 1, 128>}, {pipeline_mode = #tpu.pipeline_mode<synchronous>, transform_indices = @transform_5, window_bounds = array<i64: 1, 128>}, {transform_indices = @transform_6, window_bounds = array<i64: 1, 64, 128>}]} {
    %c0 = arith.constant 0 : index
    %c0_0 = arith.constant 0 : index
    %c0_1 = arith.constant 0 : index
    %0 = vector.load %arg1[%c0, %c0_0, %c0_1] : memref<1x64x128xbf16, #tpu.memory_space<vmem>>, vector<1x64x128xbf16>
    %1 = vector.shape_cast %0 : vector<1x64x128xbf16> to vector<64x128xbf16>
    %2 = arith.extf %1 : vector<64x128xbf16> to vector<64x128xf32>
    %c0_2 = arith.constant 0 : index
    %c0_3 = arith.constant 0 : index
    %3 = vector.load %arg3[%c0_2, %c0_3] : memref<1x128xf32, #tpu.memory_space<vmem>>, vector<1x128xf32>
    %4 = vector.broadcast %3 : vector<1x128xf32> to vector<64x128xf32>
    %5 = arith.mulf %2, %4 : vector<64x128xf32>
    %c0_4 = arith.constant 0 : index
    %c0_5 = arith.constant 0 : index
    %6 = vector.load %arg4[%c0_4, %c0_5] : memref<1x128xf32, #tpu.memory_space<vmem>>, vector<1x128xf32>
    %7 = vector.broadcast %6 : vector<1x128xf32> to vector<64x128xf32>
    %8 = arith.addf %5, %7 : vector<64x128xf32>
    %c0_6 = arith.constant 0 : index
    %c0_7 = arith.constant 0 : index
    %c0_8 = arith.constant 0 : index
    %9 = vector.load %arg2[%c0_6, %c0_7, %c0_8] : memref<1x64x128xbf16, #tpu.memory_space<vmem>>, vector<1x64x128xbf16>
    %10 = vector.shape_cast %9 : vector<1x64x128xbf16> to vector<64x128xbf16>
    %11 = arith.extf %10 : vector<64x128xbf16> to vector<64x128xf32>
    %c0_9 = arith.constant 0 : index
    %c0_10 = arith.constant 0 : index
    %12 = vector.load %arg5[%c0_9, %c0_10] : memref<1x128xf32, #tpu.memory_space<vmem>>, vector<1x128xf32>
    %13 = vector.broadcast %12 : vector<1x128xf32> to vector<64x128xf32>
    %14 = arith.mulf %11, %13 : vector<64x128xf32>
    %c0_11 = arith.constant 0 : index
    %c0_12 = arith.constant 0 : index
    %15 = vector.load %arg6[%c0_11, %c0_12] : memref<1x128xf32, #tpu.memory_space<vmem>>, vector<1x128xf32>
    %16 = vector.broadcast %15 : vector<1x128xf32> to vector<64x128xf32>
    %17 = arith.addf %14, %16 : vector<64x128xf32>
    %18 = arith.addf %8, %17 : vector<64x128xf32>
    %cst = arith.constant 0.000000e+00 : f32
    %19 = vector.broadcast %cst : f32 to vector<64x128xf32>
    %20 = arith.cmpf ogt, %18, %19 : vector<64x128xf32>
    %cst_13 = arith.constant 1.000000e-01 : f32
    %21 = vector.broadcast %cst_13 : f32 to vector<64x128xf32>
    %22 = arith.mulf %21, %18 : vector<64x128xf32>
    %23 = arith.select %20, %18, %22 : vector<64x128xi1>, vector<64x128xf32>
    %c0_14 = arith.constant 0 : index
    %c0_15 = arith.constant 0 : index
    %c0_16 = arith.constant 0 : index
    %24 = vector.load %arg7[%c0_14, %c0_15, %c0_16] : memref<1x64x128xf32, #tpu.memory_space<vmem>>, vector<1x64x128xf32>
    %25 = vector.shape_cast %24 : vector<1x64x128xf32> to vector<64x128xf32>
    %26 = vector.shape_cast %23 : vector<64x128xf32> to vector<1x64x128xf32>
    tpu.vector_store %arg7[%c0_14, %c0_15, %c0_16], %26 {strides = array<i32>} : memref<1x64x128xf32, #tpu.memory_space<vmem>>, vector<1x64x128xf32>,
    return
  }
  func.func @transform_0(%arg0: i32) -> (i32, i32, i32) {
    %c0_i32 = arith.constant 0 : i32
    %c0_i32_0 = arith.constant 0 : i32
    %c0_i32_1 = arith.constant 0 : i32
    return %arg0, %c0_i32, %c0_i32_0 : i32, i32, i32
  }
  func.func @transform_1(%arg0: i32) -> (i32, i32, i32) {
    %c0_i32 = arith.constant 0 : i32
    %c0_i32_0 = arith.constant 0 : i32
    %c0_i32_1 = arith.constant 0 : i32
    return %arg0, %c0_i32, %c0_i32_0 : i32, i32, i32
  }
  func.func @transform_2(%arg0: i32) -> (i32, i32) {
    %c0_i32 = arith.constant 0 : i32
    %c0_i32_0 = arith.constant 0 : i32
    %c0_i32_1 = arith.constant 0 : i32
    return %c0_i32, %c0_i32_0 : i32, i32
  }
  func.func @transform_3(%arg0: i32) -> (i32, i32) {
    %c0_i32 = arith.constant 0 : i32
    %c0_i32_0 = arith.constant 0 : i32
    %c0_i32_1 = arith.constant 0 : i32
    return %c0_i32, %c0_i32_0 : i32, i32
  }
  func.func @transform_4(%arg0: i32) -> (i32, i32) {
    %c0_i32 = arith.constant 0 : i32
    %c0_i32_0 = arith.constant 0 : i32
    %c0_i32_1 = arith.constant 0 : i32
    return %c0_i32, %c0_i32_0 : i32, i32
  }
  func.func @transform_5(%arg0: i32) -> (i32, i32) {
    %c0_i32 = arith.constant 0 : i32
    %c0_i32_0 = arith.constant 0 : i32
    %c0_i32_1 = arith.constant 0 : i32
    return %c0_i32, %c0_i32_0 : i32, i32
  }
  func.func @transform_6(%arg0: i32) -> (i32, i32, i32) {
    %c0_i32 = arith.constant 0 : i32
    %c0_i32_0 = arith.constant 0 : i32
    %c0_i32_1 = arith.constant 0 : i32
    return %arg0, %c0_i32, %c0_i32_0 : i32, i32, i32
  }
}

</mosaic_0001>

<llo_original>
// kernel: _lambda_.5
$region0: #{_lambda_.5}
  #allocation0 [shape = 'u32[]', space=smem, size = 0x4, offset = 0x4, fixed_abs, tag = 'smem constant byte address 0x4 - core index']
  #allocation1 [shape = 'u32[72,128]{1,0:T(1,128)}', space=vmem, size = 0x9000, scoped, tag = 'internal scratch']
  %s0 = inlined_call_operand.vmem [shape: bf16[2,64,128], index: 0, kind: input, shape index: {}]
  %s1 = inlined_call_operand.vmem [shape: bf16[2,64,128], index: 1, kind: input, shape index: {}]
  %s2 = inlined_call_operand.vmem [shape: f32[1,128], index: 2, kind: input, shape index: {}]
  %s3 = inlined_call_operand.vmem [shape: f32[1,128], index: 3, kind: input, shape index: {}]
  %s4 = inlined_call_operand.vmem [shape: f32[1,128], index: 4, kind: input, shape index: {}]
  %s5 = inlined_call_operand.vmem [shape: f32[1,128], index: 5, kind: input, shape index: {}]
  %s6 = inlined_call_operand.vmem [shape: f32[2,64,128], index: 6, kind: output, shape index: {}]
  %s7 = sld [smem:[#allocation0]]
  $region57: #{_lambda_.5} parent=0
    _
  %s9 = ssub.s32 1, %s7
  %s10 = scalar_select 0, %s9, %s7
  loop: start=0, step=1, limit=4
  $region2: #{_lambda_.5} parent=0 // loop_pre_header
    _
  $region3: #{_lambda_.5} parent=0 // loop_header
    %s12 = sphi 0, %s16
    %p13 = scmp.ge.s32.totalorder %s12, 4
    %s22 = sphi 0, %s24
    %s25 = sphi 0, %s22
    %s26 = sphi 0, %s25
    %s42 = sphi 0, %s26
    %s48 = sphi 0, %s50
    %s51 = sphi 0, %s48
    %s52 = sphi 0, %s51
    %s68 = sphi 0, %s52
    %s72 = sphi 0, %s72
    %s74 = sphi 0, %s72
    %s75 = sphi 0, %s74
    %s89 = sphi 0, %s75
    %s93 = sphi 0, %s93
    %s95 = sphi 0, %s93
    %s96 = sphi 0, %s95
    %s110 = sphi 0, %s96
    %s114 = sphi 0, %s114
    %s116 = sphi 0, %s114
    %s117 = sphi 0, %s116
    %s131 = sphi 0, %s117
    %s135 = sphi 0, %s135
    %s137 = sphi 0, %s135
    %s138 = sphi 0, %s137
    %s152 = sphi 0, %s138
    %s158 = sphi 0, %s160
    %s161 = sphi 0, %s158
    %s162 = sphi 0, %s161
    %s178 = sphi 0, %s162
  $region4: #{_lambda_.5} parent=0 // loop_header_branch
    %15 = sbr.rel (%p13) target = $region8
  $region5: #{_lambda_.5} parent=0 // loop_body
    %s17 = ssub.s32 %s12, 1
    %s18 = ssub.s32 %s12, 2
    %s19 = sadd.s32 %s12, 1
    %s20 = ssub.s32 %s12, %s19
    %p21 = scmp.eq.s32.totalorder %s20, 0
    %s23 = sadd.s32 %s22, 1
    %s24 = scalar_select %p21, %s22, %s23
    %p27 = pneg %p21
    %p28 = scmp.eq.s32.totalorder %s12, 1
    %p29 = por %p27, %p28
    %p30 = scmp.ne.s32.totalorder %s22, %s25
    %p31 = scmp.eq.s32.totalorder %s12, 0
    %p32 = por %p30, %p31
    %p33 = scmp.ne.s32.totalorder %s22, %s25
    %p34 = scmp.eq.s32.totalorder %s17, 1
    %p35 = por %p33, %p34
    %p36 = scmp.ne.s32.totalorder %s25, %s26
    %p37 = scmp.eq.s32.totalorder %s17, 0
    %p38 = por %p36, %p37
    %p39 = scmp.ne.s32.totalorder %s25, %s26
    %p40 = scmp.eq.s32.totalorder %s18, 1
    %p41 = por %p39, %p40
    %p43 = scmp.ne.s32.totalorder %s26, %s42
    %p44 = scmp.eq.s32.totalorder %s18, 0
    %p45 = por %p43, %p44
    %s46 = ssub.s32 %s12, %s19
    %p47 = scmp.eq.s32.totalorder %s46, 0
    %s49 = sadd.s32 %s48, 1
    %s50 = scalar_select %p47, %s48, %s49
    %p53 = pneg %p47
    %p54 = scmp.eq.s32.totalorder %s12, 1
    %p55 = por %p53, %p54
    %p56 = scmp.ne.s32.totalorder %s48, %s51
    %p57 = scmp.eq.s32.totalorder %s12, 0
    %p58 = por %p56, %p57
    %p59 = scmp.ne.s32.totalorder %s48, %s51
    %p60 = scmp.eq.s32.totalorder %s17, 1
    %p61 = por %p59, %p60
    %p62 = scmp.ne.s32.totalorder %s51, %s52
    %p63 = scmp.eq.s32.totalorder %s17, 0
    %p64 = por %p62, %p63
    %p65 = scmp.ne.s32.totalorder %s51, %s52
    %p66 = scmp.eq.s32.totalorder %s18, 1
    %p67 = por %p65, %p66
    %p69 = scmp.ne.s32.totalorder %s52, %s68
    %p70 = scmp.eq.s32.totalorder %s18, 0
    %p71 = por %p69, %p70
    %s73 = sadd.s32 %s72, 1
    %p76 = scmp.eq.s32.totalorder %s12, 1
    %p77 = scmp.ne.s32.totalorder %s72, %s74
    %p78 = scmp.eq.s32.totalorder %s12, 0
    %p79 = por %p77, %p78
    %p80 = scmp.ne.s32.totalorder %s72, %s74
    %p81 = scmp.eq.s32.totalorder %s17, 1
    %p82 = por %p80, %p81
    %p83 = scmp.ne.s32.totalorder %s74, %s75
    %p84 = scmp.eq.s32.totalorder %s17, 0
    %p85 = por %p83, %p84
    %p86 = scmp.ne.s32.totalorder %s74, %s75
    %p87 = scmp.eq.s32.totalorder %s18, 1
    %p88 = por %p86, %p87
    %p90 = scmp.ne.s32.totalorder %s75, %s89
    %p91 = scmp.eq.s32.totalorder %s18, 0
    %p92 = por %p90, %p91
    %s94 = sadd.s32 %s93, 1
    %p97 = scmp.eq.s32.totalorder %s12, 1
    %p98 = scmp.ne.s32.totalorder %s93, %s95
    %p99 = scmp.eq.s32.totalorder %s12, 0
    %p100 = por %p98, %p99
    %p101 = scmp.ne.s32.totalorder %s93, %s95
    %p102 = scmp.eq.s32.totalorder %s17, 1
    %p103 = por %p101, %p102
    %p104 = scmp.ne.s32.totalorder %s95, %s96
    %p105 = scmp.eq.s32.totalorder %s17, 0
    %p106 = por %p104, %p105
    %p107 = scmp.ne.s32.totalorder %s95, %s96
    %p108 = scmp.eq.s32.totalorder %s18, 1
    %p109 = por %p107, %p108
    %p111 = scmp.ne.s32.totalorder %s96, %s110
    %p112 = scmp.eq.s32.totalorder %s18, 0
    %p113 = por %p111, %p112
    %s115 = sadd.s32 %s114, 1
    %p118 = scmp.eq.s32.totalorder %s12, 1
    %p119 = scmp.ne.s32.totalorder %s114, %s116
    %p120 = scmp.eq.s32.totalorder %s12, 0
    %p121 = por %p119, %p120
    %p122 = scmp.ne.s32.totalorder %s114, %s116
    %p123 = scmp.eq.s32.totalorder %s17, 1
    %p124 = por %p122, %p123
    %p125 = scmp.ne.s32.totalorder %s116, %s117
    %p126 = scmp.eq.s32.totalorder %s17, 0
    %p127 = por %p125, %p126
    %p128 = scmp.ne.s32.totalorder %s116, %s117
    %p129 = scmp.eq.s32.totalorder %s18, 1
    %p130 = por %p128, %p129
    %p132 = scmp.ne.s32.totalorder %s117, %s131
    %p133 = scmp.eq.s32.totalorder %s18, 0
    %p134 = por %p132, %p133
    %s136 = sadd.s32 %s135, 1
    %p139 = scmp.eq.s32.totalorder %s12, 1
    %p140 = scmp.ne.s32.totalorder %s135, %s137
    %p141 = scmp.eq.s32.totalorder %s12, 0
    %p142 = por %p140, %p141
    %p143 = scmp.ne.s32.totalorder %s135, %s137
    %p144 = scmp.eq.s32.totalorder %s17, 1
    %p145 = por %p143, %p144
    %p146 = scmp.ne.s32.totalorder %s137, %s138
    %p147 = scmp.eq.s32.totalorder %s17, 0
    %p148 = por %p146, %p147
    %p149 = scmp.ne.s32.totalorder %s137, %s138
    %p150 = scmp.eq.s32.totalorder %s18, 1
    %p151 = por %p149, %p150
    %p153 = scmp.ne.s32.totalorder %s138, %s152
    %p154 = scmp.eq.s32.totalorder %s18, 0
    %p155 = por %p153, %p154
    %s156 = ssub.s32 %s12, %s19
    %p157 = scmp.eq.s32.totalorder %s156, 0
    %s159 = sadd.s32 %s158, 1
    %s160 = scalar_select %p157, %s158, %s159
    %p163 = pneg %p157
    %p164 = scmp.eq.s32.totalorder %s12, 1
    %p165 = por %p163, %p164
    %p166 = scmp.ne.s32.totalorder %s158, %s161
    %p167 = scmp.eq.s32.totalorder %s12, 0
    %p168 = por %p166, %p167
    %p169 = scmp.ne.s32.totalorder %s158, %s161
    %p170 = scmp.eq.s32.totalorder %s17, 1
    %p171 = por %p169, %p170
    %p172 = scmp.ne.s32.totalorder %s161, %s162
    %p173 = scmp.eq.s32.totalorder %s17, 0
    %p174 = por %p172, %p173
    %p175 = scmp.ne.s32.totalorder %s161, %s162
    %p176 = scmp.eq.s32.totalorder %s18, 1
    %p177 = por %p175, %p176
    %p179 = scmp.ne.s32.totalorder %s162, %s178
    %p180 = scmp.eq.s32.totalorder %s18, 0
    %p181 = por %p179, %p180
    %p182 = scmp.le.s32.totalorder 1, %s12
    %p183 = scmp.lt.s32.totalorder %s12, 3
    %p184 = pnand %p182, %p183
    %p185 = pneg %p184
    // Predicated region
    $region9: #{_lambda_.5} parent=5 // pred_check
      _
    $region10: #{_lambda_.5} parent=5 // pred_check_branch
      %187 = sbr.rel (%p184) target = $region12
    $region11: #{_lambda_.5} parent=5 // pred_region
      %s188 = ssub.s32 %s12, 1
      // Predicated region
      $region13: #{_lambda_.5} parent=11 // pred_check
        %p189 = pneg %p85
      $region14: #{_lambda_.5} parent=11 // pred_check_branch
        %191 = sbr.rel (%p189) target = $region16
      $region15: #{_lambda_.5} parent=11 // pred_region
        _
      $region16: #{_lambda_.5} parent=11 // pred_fallthru
        _
      // Predicated region
      $region17: #{_lambda_.5} parent=11 // pred_check
        %p192 = pneg %p106
      $region18: #{_lambda_.5} parent=11 // pred_check_branch
        %194 = sbr.rel (%p192) target = $region20
      $region19: #{_lambda_.5} parent=11 // pred_region
        _
      $region20: #{_lambda_.5} parent=11 // pred_fallthru
        _
      // Predicated region
      $region21: #{_lambda_.5} parent=11 // pred_check
        %p195 = pneg %p127
      $region22: #{_lambda_.5} parent=11 // pred_check_branch
        %197 = sbr.rel (%p195) target = $region24
      $region23: #{_lambda_.5} parent=11 // pred_region
        _
      $region24: #{_lambda_.5} parent=11 // pred_fallthru
        _
      // Predicated region
      $region25: #{_lambda_.5} parent=11 // pred_check
        %p198 = pneg %p148
      $region26: #{_lambda_.5} parent=11 // pred_check_branch
        %200 = sbr.rel (%p198) target = $region28
      $region27: #{_lambda_.5} parent=11 // pred_region
        _
      $region28: #{_lambda_.5} parent=11 // pred_fallthru
        _
    $region12: #{_lambda_.5} parent=5 // pred_fallthru
      _
    %p201 = scmp.lt.s32.totalorder %s12, 2
    // Predicated region
    $region29: #{_lambda_.5} parent=5 // pred_check
      %p202 = pneg %p201
    $region30: #{_lambda_.5} parent=5 // pred_check_branch
      %204 = sbr.rel (%p202) target = $region32
    $region31: #{_lambda_.5} parent=5 // pred_region
      // Predicated region
      $region33: #{_lambda_.5} parent=31 // pred_check
        %p205 = pneg %p32
      $region34: #{_lambda_.5} parent=31 // pred_check_branch
        %207 = sbr.rel (%p205) target = $region36
      $region35: #{_lambda_.5} parent=31 // pred_region
        %p208 = scmp.lt.s32.totalorder %s12, 1
        %s209 = scalar_select %p208, %s12, 1
        %s210 = smul.addr %s209, 8
        %s211 = smul.addr %s210, 4
        %s212 = scalar_lea.vmem %s0, %s211
      $region36: #{_lambda_.5} parent=31 // pred_fallthru
        _
      // Predicated region
      $region37: #{_lambda_.5} parent=31 // pred_check
        %p213 = pneg %p58
      $region38: #{_lambda_.5} parent=31 // pred_check_branch
        %215 = sbr.rel (%p213) target = $region40
      $region39: #{_lambda_.5} parent=31 // pred_region
        %p216 = scmp.lt.s32.totalorder %s12, 1
        %s217 = scalar_select %p216, %s12, 1
        %s218 = smul.addr %s217, 8
        %s219 = smul.addr %s218, 4
        %s220 = scalar_lea.vmem %s1, %s219
      $region40: #{_lambda_.5} parent=31 // pred_fallthru
        _
    $region32: #{_lambda_.5} parent=5 // pred_fallthru
      _
    %p221 = scmp.le.s32.totalorder 1, %s12
    %p222 = scmp.lt.s32.totalorder %s12, 3
    %p223 = pnand %p221, %p222
    %p224 = pneg %p223
    // Predicated region
    $region41: #{_lambda_.5} parent=5 // pred_check
      _
    $region42: #{_lambda_.5} parent=5 // pred_check_branch
      %226 = sbr.rel (%p223) target = $region44
    $region43: #{_lambda_.5} parent=5 // pred_region
      %s227 = ssub.s32 %s12, 1
      %p228 = scmp.lt.s32.totalorder %s17, 1
      %s229 = scalar_select %p228, %s17, 1
      %s230 = smul.addr %s229, 8
      %s231 = smul.addr %s230, 4
      %s232 = scalar_lea.vmem %s0, %s231
      %p233 = pneg %p38
      %p234 = pneg %p35
      %p235 = scmp.lt.s32.totalorder %s17, 1
      %s236 = scalar_select %p235, %s17, 1
      %s237 = smul.addr %s236, 8
      %s238 = smul.addr %s237, 4
      %s239 = scalar_lea.vmem %s1, %s238
      %p240 = pneg %p64
      %p241 = pneg %p61
      %p242 = pneg %p85
      %p243 = pneg %p82
      %p244 = pneg %p106
      %p245 = pneg %p103
      %p246 = pneg %p127
      %p247 = pneg %p124
      %p248 = pneg %p148
      %p249 = pneg %p145
      %p250 = pneg %p174
      %p251 = pneg %p171
      %p252 = scmp.lt.s32.totalorder %s17, 1
      %s253 = scalar_select %p252, %s17, 1
      %s254 = smul.addr %s253, 8
      %s255 = smul.addr %s254, 8
      %s256 = scalar_lea.vmem %s6, %s255
      %p257 = scmp.lt.s32.totalorder %s17, 1
      %s258 = scalar_select %p257, %s17, 1
      %s259 = smul.addr %s258, 8
      %s260 = smul.addr %s259, 4
      %s261 = scalar_lea.vmem %s0, %s260
      %p262 = scmp.lt.s32.totalorder %s17, 1
      %s263 = scalar_select %p262, %s17, 1
      %s264 = smul.addr %s263, 8
      %s265 = smul.addr %s264, 4
      %s266 = scalar_lea.vmem %s1, %s265
      %p267 = scmp.lt.s32.totalorder %s17, 1
      %s268 = scalar_select %p267, %s17, 1
      %s269 = smul.addr %s268, 8
      %s270 = smul.addr %s269, 8
      %s271 = scalar_lea.vmem %s6, %s270
      %v272 = vld [vmem:[%s261] sm:$0xf]
      %v273 = vld [vmem:[%s261 + $0x4] sm:$0xf]
      %v274 = vld [vmem:[%s261 + $0x8] sm:$0xf]
      %v275 = vld [vmem:[%s261 + $0xc] sm:$0xf]
      %v276 = vld [vmem:[%s261 + $0x10] sm:$0xf]
      %v277 = vld [vmem:[%s261 + $0x14] sm:$0xf]
      %v278 = vld [vmem:[%s261 + $0x18] sm:$0xf]
      %v279 = vld [vmem:[%s261 + $0x1c] sm:$0xf]
      %v280 = vunpack.c.l.bf16 %v272
      %v281 = vunpack.c.l.bf16 %v273
      %v282 = vunpack.c.l.bf16 %v274
      %v283 = vunpack.c.l.bf16 %v275
      %v284 = vunpack.c.l.bf16 %v276
      %v285 = vunpack.c.l.bf16 %v277
      %v286 = vunpack.c.l.bf16 %v278
      %v287 = vunpack.c.l.bf16 %v279
      %v288 = vld [vmem:[%s2] sm:$0x1]
      %v290 = vperm.slane %v288, 0
      %v292 = vmul.f32 %v280, %v290
      %v293 = vmul.f32 %v281, %v290
      %v294 = vmul.f32 %v282, %v290
      %v295 = vmul.f32 %v283, %v290
      %v296 = vmul.f32 %v284, %v290
      %v297 = vmul.f32 %v285, %v290
      %v298 = vmul.f32 %v286, %v290
      %v299 = vmul.f32 %v287, %v290
      %v300 = vld [vmem:[%s3] sm:$0x1]
      %v302 = vperm.slane %v300, 0
      %v304 = vadd.f32 %v292, %v302
      %v305 = vadd.f32 %v293, %v302
      %v306 = vadd.f32 %v294, %v302
      %v307 = vadd.f32 %v295, %v302
      %v308 = vadd.f32 %v296, %v302
      %v309 = vadd.f32 %v297, %v302
      %v310 = vadd.f32 %v298, %v302
      %v311 = vadd.f32 %v299, %v302
      %v312 = vld [vmem:[%s266] sm:$0xf]
      %v313 = vld [vmem:[%s266 + $0x4] sm:$0xf]
      %v314 = vld [vmem:[%s266 + $0x8] sm:$0xf]
      %v315 = vld [vmem:[%s266 + $0xc] sm:$0xf]
      %v316 = vld [vmem:[%s266 + $0x10] sm:$0xf]
      %v317 = vld [vmem:[%s266 + $0x14] sm:$0xf]
      %v318 = vld [vmem:[%s266 + $0x18] sm:$0xf]
      %v319 = vld [vmem:[%s266 + $0x1c] sm:$0xf]
      %v320 = vunpack.c.l.bf16 %v312
      %v321 = vunpack.c.l.bf16 %v313
      %v322 = vunpack.c.l.bf16 %v314
      %v323 = vunpack.c.l.bf16 %v315
      %v324 = vunpack.c.l.bf16 %v316
      %v325 = vunpack.c.l.bf16 %v317
      %v326 = vunpack.c.l.bf16 %v318
      %v327 = vunpack.c.l.bf16 %v319
      %v328 = vld [vmem:[%s4] sm:$0x1]
      %v330 = vperm.slane %v328, 0
      %v332 = vmul.f32 %v320, %v330
      %v333 = vmul.f32 %v321, %v330
      %v334 = vmul.f32 %v322, %v330
      %v335 = vmul.f32 %v323, %v330
      %v336 = vmul.f32 %v324, %v330
      %v337 = vmul.f32 %v325, %v330
      %v338 = vmul.f32 %v326, %v330
      %v339 = vmul.f32 %v327, %v330
      %v340 = vld [vmem:[%s5] sm:$0x1]
      %v342 = vperm.slane %v340, 0
      %v344 = vadd.f32 %v332, %v342
      %v345 = vadd.f32 %v333, %v342
      %v346 = vadd.f32 %v334, %v342
      %v347 = vadd.f32 %v335, %v342
      %v348 = vadd.f32 %v336, %v342
      %v349 = vadd.f32 %v337, %v342
      %v350 = vadd.f32 %v338, %v342
      %v351 = vadd.f32 %v339, %v342
      %v352 = vadd.f32 %v304, %v344
      %v353 = vadd.f32 %v305, %v345
      %v354 = vadd.f32 %v306, %v346
      %v355 = vadd.f32 %v307, %v347
      %v356 = vadd.f32 %v308, %v348
      %v357 = vadd.f32 %v309, %v349
      %v358 = vadd.f32 %v310, %v350
      %v359 = vadd.f32 %v311, %v351
      %vm360 = vcmp.gt.f32.partialorder %v352, 0.0
      %vm361 = vcmp.gt.f32.partialorder %v353, 0.0
      %vm362 = vcmp.gt.f32.partialorder %v354, 0.0
      %vm363 = vcmp.gt.f32.partialorder %v355, 0.0
      %vm364 = vcmp.gt.f32.partialorder %v356, 0.0
      %vm365 = vcmp.gt.f32.partialorder %v357, 0.0
      %vm366 = vcmp.gt.f32.partialorder %v358, 0.0
      %vm367 = vcmp.gt.f32.partialorder %v359, 0.0
      %v368 = vmul.f32 %v352, 0.1
      %v369 = vmul.f32 %v353, 0.1
      %v370 = vmul.f32 %v354, 0.1
      %v371 = vmul.f32 %v355, 0.1
      %v372 = vmul.f32 %v356, 0.1
      %v373 = vmul.f32 %v357, 0.1
      %v374 = vmul.f32 %v358, 0.1
      %v375 = vmul.f32 %v359, 0.1
      %v376 = vsel %vm360, %v352, %v368
      %v377 = vsel %vm361, %v353, %v369
      %v378 = vsel %vm362, %v354, %v370
      %v379 = vsel %vm363, %v355, %v371
      %v380 = vsel %vm364, %v356, %v372
      %v381 = vsel %vm365, %v357, %v373
      %v382 = vsel %vm366, %v358, %v374
      %v383 = vsel %vm367, %v359, %v375
      %384 = vst [vmem:[%s271] sm:$0xff] %v376
      %385 = vst [vmem:[%s271 + $0x8] sm:$0xff] %v377
      %386 = vst [vmem:[%s271 + $0x10] sm:$0xff] %v378
      %387 = vst [vmem:[%s271 + $0x18] sm:$0xff] %v379
      %388 = vst [vmem:[%s271 + $0x20] sm:$0xff] %v380
      %389 = vst [vmem:[%s271 + $0x28] sm:$0xff] %v381
      %390 = vst [vmem:[%s271 + $0x30] sm:$0xff] %v382
      %391 = vst [vmem:[%s271 + $0x38] sm:$0xff] %v383
      %p392 = scmp.lt.s32.totalorder %s17, 1
      %s393 = scalar_select %p392, %s17, 1
      %s394 = smul.addr %s393, 8
      %s395 = smul.addr %s394, 8
      %s396 = scalar_lea.vmem %s6, %s395
      // Predicated region
      $region45: #{_lambda_.5} parent=43 // pred_check
        %p397 = pneg %p171
      $region46: #{_lambda_.5} parent=43 // pred_check_branch
        %399 = sbr.rel (%p397) target = $region48
      $region47: #{_lambda_.5} parent=43 // pred_region
        _
      $region48: #{_lambda_.5} parent=43 // pred_fallthru
        _
    $region44: #{_lambda_.5} parent=5 // pred_fallthru
      _
    %p400 = scmp.le.s32.totalorder 2, %s12
    // Predicated region
    $region49: #{_lambda_.5} parent=5 // pred_check
      %p401 = pneg %p400
    $region50: #{_lambda_.5} parent=5 // pred_check_branch
      %403 = sbr.rel (%p401) target = $region52
    $region51: #{_lambda_.5} parent=5 // pred_region
      %s404 = ssub.s32 %s12, 2
      // Predicated region
      $region53: #{_lambda_.5} parent=51 // pred_check
        %p405 = pneg %p177
      $region54: #{_lambda_.5} parent=51 // pred_check_branch
        %407 = sbr.rel (%p405) target = $region56
      $region55: #{_lambda_.5} parent=51 // pred_region
        %p408 = scmp.lt.s32.totalorder %s18, 1
        %s409 = scalar_select %p408, %s18, 1
        %s410 = smul.addr %s409, 8
        %s411 = smul.addr %s410, 8
        %s412 = scalar_lea.vmem %s6, %s411
      $region56: #{_lambda_.5} parent=51 // pred_fallthru
        _
    $region52: #{_lambda_.5} parent=5 // pred_fallthru
      _
  $region6: #{_lambda_.5} parent=0 // loop_footer
    %s16 = sadd.s32 1, %s12
  $region7: #{_lambda_.5} parent=0 // loop_footer_branch
    %11 = sbr.rel target = $region3
  $region8: #{_lambda_.5} parent=0 // loop_exit
    _

// kernel: _lambda_.3
$region0: #{_lambda_.3}
  #allocation0 [shape = 'u32[]', space=smem, size = 0x4, offset = 0x4, fixed_abs, tag = 'smem constant byte address 0x4 - core index']
  #allocation1 [shape = 'u32[72,128]{1,0:T(1,128)}', space=vmem, size = 0x9000, scoped, tag = 'internal scratch']
  %s0 = inlined_call_operand.vmem [shape: bf16[2,64,72], index: 0, kind: input, shape index: {}]
  %s1 = inlined_call_operand.vmem [shape: bf16[72,256], index: 1, kind: input, shape index: {}]
  %s2 = inlined_call_operand.vmem [shape: bf16[2,64,128], index: 2, kind: output, shape index: {0}]
  %s3 = inlined_call_operand.vmem [shape: bf16[2,64,128], index: 3, kind: output, shape index: {1}]
  %s4 = inlined_call_operand.vmem [shape: f32[16,128], index: 4, kind: output, shape index: {2}]
  %5 = xla_tuple %s2, %s3, %s4
  %s6 = sld [smem:[#allocation0]]
  $region57: #{_lambda_.3} parent=0
    _
  %s8 = ssub.s32 1, %s6
  %s9 = scalar_select 0, %s8, %s6
  loop: start=0, step=1, limit=4
  $region2: #{_lambda_.3} parent=0 // loop_pre_header
    _
  $region3: #{_lambda_.3} parent=0 // loop_header
    %s11 = sphi 0, %s15
    %p12 = scmp.ge.s32.totalorder %s11, 4
    %s21 = sphi 0, %s23
    %s24 = sphi 0, %s21
    %s25 = sphi 0, %s24
    %s41 = sphi 0, %s25
    %s45 = sphi 0, %s45
    %s47 = sphi 0, %s45
    %s48 = sphi 0, %s47
    %s62 = sphi 0, %s48
    %s68 = sphi 0, %s70
    %s71 = sphi 0, %s68
    %s72 = sphi 0, %s71
    %s88 = sphi 0, %s72
    %s94 = sphi 0, %s96
    %s97 = sphi 0, %s94
    %s98 = sphi 0, %s97
    %s114 = sphi 0, %s98
    %s120 = sphi 0, %s122
    %s123 = sphi 0, %s120
    %s124 = sphi 0, %s123
    %s140 = sphi 0, %s124
  $region4: #{_lambda_.3} parent=0 // loop_header_branch
    %14 = sbr.rel (%p12) target = $region8
  $region5: #{_lambda_.3} parent=0 // loop_body
    %s16 = ssub.s32 %s11, 1
    %s17 = ssub.s32 %s11, 2
    %s18 = sadd.s32 %s11, 1
    %s19 = ssub.s32 %s11, %s18
    %p20 = scmp.eq.s32.totalorder %s19, 0
    %s22 = sadd.s32 %s21, 1
    %s23 = scalar_select %p20, %s21, %s22
    %p26 = pneg %p20
    %p27 = scmp.eq.s32.totalorder %s11, 1
    %p28 = por %p26, %p27
    %p29 = scmp.ne.s32.totalorder %s21, %s24
    %p30 = scmp.eq.s32.totalorder %s11, 0
    %p31 = por %p29, %p30
    %p32 = scmp.ne.s32.totalorder %s21, %s24
    %p33 = scmp.eq.s32.totalorder %s16, 1
    %p34 = por %p32, %p33
    %p35 = scmp.ne.s32.totalorder %s24, %s25
    %p36 = scmp.eq.s32.totalorder %s16, 0
    %p37 = por %p35, %p36
    %p38 = scmp.ne.s32.totalorder %s24, %s25
    %p39 = scmp.eq.s32.totalorder %s17, 1
    %p40 = por %p38, %p39
    %p42 = scmp.ne.s32.totalorder %s25, %s41
    %p43 = scmp.eq.s32.totalorder %s17, 0
    %p44 = por %p42, %p43
    %s46 = sadd.s32 %s45, 1
    %p49 = scmp.eq.s32.totalorder %s11, 1
    %p50 = scmp.ne.s32.totalorder %s45, %s47
    %p51 = scmp.eq.s32.totalorder %s11, 0
    %p52 = por %p50, %p51
    %p53 = scmp.ne.s32.totalorder %s45, %s47
    %p54 = scmp.eq.s32.totalorder %s16, 1
    %p55 = por %p53, %p54
    %p56 = scmp.ne.s32.totalorder %s47, %s48
    %p57 = scmp.eq.s32.totalorder %s16, 0
    %p58 = por %p56, %p57
    %p59 = scmp.ne.s32.totalorder %s47, %s48
    %p60 = scmp.eq.s32.totalorder %s17, 1
    %p61 = por %p59, %p60
    %p63 = scmp.ne.s32.totalorder %s48, %s62
    %p64 = scmp.eq.s32.totalorder %s17, 0
    %p65 = por %p63, %p64
    %s66 = ssub.s32 %s11, %s18
    %p67 = scmp.eq.s32.totalorder %s66, 0
    %s69 = sadd.s32 %s68, 1
    %s70 = scalar_select %p67, %s68, %s69
    %p73 = pneg %p67
    %p74 = scmp.eq.s32.totalorder %s11, 1
    %p75 = por %p73, %p74
    %p76 = scmp.ne.s32.totalorder %s68, %s71
    %p77 = scmp.eq.s32.totalorder %s11, 0
    %p78 = por %p76, %p77
    %p79 = scmp.ne.s32.totalorder %s68, %s71
    %p80 = scmp.eq.s32.totalorder %s16, 1
    %p81 = por %p79, %p80
    %p82 = scmp.ne.s32.totalorder %s71, %s72
    %p83 = scmp.eq.s32.totalorder %s16, 0
    %p84 = por %p82, %p83
    %p85 = scmp.ne.s32.totalorder %s71, %s72
    %p86 = scmp.eq.s32.totalorder %s17, 1
    %p87 = por %p85, %p86
    %p89 = scmp.ne.s32.totalorder %s72, %s88
    %p90 = scmp.eq.s32.totalorder %s17, 0
    %p91 = por %p89, %p90
    %s92 = ssub.s32 %s11, %s18
    %p93 = scmp.eq.s32.totalorder %s92, 0
    %s95 = sadd.s32 %s94, 1
    %s96 = scalar_select %p93, %s94, %s95
    %p99 = pneg %p93
    %p100 = scmp.eq.s32.totalorder %s11, 1
    %p101 = por %p99, %p100
    %p102 = scmp.ne.s32.totalorder %s94, %s97
    %p103 = scmp.eq.s32.totalorder %s11, 0
    %p104 = por %p102, %p103
    %p105 = scmp.ne.s32.totalorder %s94, %s97
    %p106 = scmp.eq.s32.totalorder %s16, 1
    %p107 = por %p105, %p106
    %p108 = scmp.ne.s32.totalorder %s97, %s98
    %p109 = scmp.eq.s32.totalorder %s16, 0
    %p110 = por %p108, %p109
    %p111 = scmp.ne.s32.totalorder %s97, %s98
    %p112 = scmp.eq.s32.totalorder %s17, 1
    %p113 = por %p111, %p112
    %p115 = scmp.ne.s32.totalorder %s98, %s114
    %p116 = scmp.eq.s32.totalorder %s17, 0
    %p117 = por %p115, %p116
    %s118 = ssub.s32 %s11, %s18
    %p119 = scmp.eq.s32.totalorder %s118, 0
    %s121 = sadd.s32 %s120, 1
    %s122 = scalar_select %p119, %s120, %s121
    %p125 = pneg %p119
    %p126 = scmp.eq.s32.totalorder %s11, 1
    %p127 = por %p125, %p126
    %p128 = scmp.ne.s32.totalorder %s120, %s123
    %p129 = scmp.eq.s32.totalorder %s11, 0
    %p130 = por %p128, %p129
    %p131 = scmp.ne.s32.totalorder %s120, %s123
    %p132 = scmp.eq.s32.totalorder %s16, 1
    %p133 = por %p131, %p132
    %p134 = scmp.ne.s32.totalorder %s123, %s124
    %p135 = scmp.eq.s32.totalorder %s16, 0
    %p136 = por %p134, %p135
    %p137 = scmp.ne.s32.totalorder %s123, %s124
    %p138 = scmp.eq.s32.totalorder %s17, 1
    %p139 = por %p137, %p138
    %p141 = scmp.ne.s32.totalorder %s124, %s140
    %p142 = scmp.eq.s32.totalorder %s17, 0
    %p143 = por %p141, %p142
    %p144 = scmp.le.s32.totalorder 1, %s11
    %p145 = scmp.lt.s32.totalorder %s11, 3
    %p146 = pnand %p144, %p145
    %p147 = pneg %p146
    // Predicated region
    $region9: #{_lambda_.3} parent=5 // pred_check
      _
    $region10: #{_lambda_.3} parent=5 // pred_check_branch
      %149 = sbr.rel (%p146) target = $region12
    $region11: #{_lambda_.3} parent=5 // pred_region
      %s150 = ssub.s32 %s11, 1
      // Predicated region
      $region13: #{_lambda_.3} parent=11 // pred_check
        %p151 = pneg %p58
      $region14: #{_lambda_.3} parent=11 // pred_check_branch
        %153 = sbr.rel (%p151) target = $region16
      $region15: #{_lambda_.3} parent=11 // pred_region
        _
      $region16: #{_lambda_.3} parent=11 // pred_fallthru
        _
    $region12: #{_lambda_.3} parent=5 // pred_fallthru
      _
    %p154 = scmp.lt.s32.totalorder %s11, 2
    // Predicated region
    $region17: #{_lambda_.3} parent=5 // pred_check
      %p155 = pneg %p154
    $region18: #{_lambda_.3} parent=5 // pred_check_branch
      %157 = sbr.rel (%p155) target = $region20
    $region19: #{_lambda_.3} parent=5 // pred_region
      // Predicated region
      $region21: #{_lambda_.3} parent=19 // pred_check
        %p158 = pneg %p31
      $region22: #{_lambda_.3} parent=19 // pred_check_branch
        %160 = sbr.rel (%p158) target = $region24
      $region23: #{_lambda_.3} parent=19 // pred_region
        %p161 = scmp.lt.s32.totalorder %s11, 1
        %s162 = scalar_select %p161, %s11, 1
        %s163 = smul.addr %s162, 8
        %s164 = smul.addr %s163, 4
        %s165 = scalar_lea.vmem %s0, %s164
      $region24: #{_lambda_.3} parent=19 // pred_fallthru
        _
    $region20: #{_lambda_.3} parent=5 // pred_fallthru
      _
    %p166 = scmp.le.s32.totalorder 1, %s11
    %p167 = scmp.lt.s32.totalorder %s11, 3
    %p168 = pnand %p166, %p167
    %p169 = pneg %p168
    // Predicated region
    $region25: #{_lambda_.3} parent=5 // pred_check
      _
    $region26: #{_lambda_.3} parent=5 // pred_check_branch
      %171 = sbr.rel (%p168) target = $region28
    $region27: #{_lambda_.3} parent=5 // pred_region
      %s172 = ssub.s32 %s11, 1
      %p173 = scmp.lt.s32.totalorder %s16, 1
      %s174 = scalar_select %p173, %s16, 1
      %s175 = smul.addr %s174, 8
      %s176 = smul.addr %s175, 4
      %s177 = scalar_lea.vmem %s0, %s176
      %p178 = pneg %p37
      %p179 = pneg %p34
      %p180 = pneg %p58
      %p181 = pneg %p55
      %p182 = pneg %p84
      %p183 = pneg %p81
      %p184 = scmp.lt.s32.totalorder %s16, 1
      %s185 = scalar_select %p184, %s16, 1
      %s186 = smul.addr %s185, 8
      %s187 = smul.addr %s186, 4
      %s188 = scalar_lea.vmem %s2, %s187
      %p189 = pneg %p110
      %p190 = pneg %p107
      %p191 = scmp.lt.s32.totalorder %s16, 1
      %s192 = scalar_select %p191, %s16, 1
      %s193 = smul.addr %s192, 8
      %s194 = smul.addr %s193, 4
      %s195 = scalar_lea.vmem %s3, %s194
      %p196 = pneg %p136
      %p197 = pneg %p133
      %p198 = scmp.lt.s32.totalorder %s16, 1
      %s199 = scalar_select %p198, %s16, 1
      %s200 = smul.addr %s199, 8
      %s201 = scalar_lea.vmem %s4, %s200
      %p202 = scmp.lt.s32.totalorder %s16, 1
      %s203 = scalar_select %p202, %s16, 1
      %s204 = smul.addr %s203, 8
      %s205 = smul.addr %s204, 4
      %s206 = scalar_lea.vmem %s0, %s205
      %p207 = scmp.lt.s32.totalorder %s16, 1
      %s208 = scalar_select %p207, %s16, 1
      %s209 = smul.addr %s208, 8
      %s210 = smul.addr %s209, 4
      %s211 = scalar_lea.vmem %s2, %s210
      %p212 = scmp.lt.s32.totalorder %s16, 1
      %s213 = scalar_select %p212, %s16, 1
      %s214 = smul.addr %s213, 8
      %s215 = smul.addr %s214, 4
      %s216 = scalar_lea.vmem %s3, %s215
      %p217 = scmp.lt.s32.totalorder %s16, 1
      %s218 = scalar_select %p217, %s16, 1
      %s219 = smul.addr %s218, 8
      %s220 = scalar_lea.vmem %s4, %s219
      %v222 = vld [vmem:[%s206] sm:$0xf]
      %v223 = vld [vmem:[%s206 + $0x4] sm:$0xf]
      %v224 = vld [vmem:[%s206 + $0x8] sm:$0xf]
      %v225 = vld [vmem:[%s206 + $0xc] sm:$0xf]
      %v226 = vld [vmem:[%s206 + $0x10] sm:$0xf]
      %v227 = vld [vmem:[%s206 + $0x14] sm:$0xf]
      %v228 = vld [vmem:[%s206 + $0x18] sm:$0xf]
      %v229 = vld [vmem:[%s206 + $0x1c] sm:$0xf]
      %v230 = vld [vmem:[%s1] sm:$0xff]
      %v231 = vld [vmem:[%s1 + $0x8] sm:$0xff]
      %v232 = vld [vmem:[%s1 + $0x10] sm:$0xff]
      %v233 = vld [vmem:[%s1 + $0x18] sm:$0xff]
      %v234 = vld [vmem:[%s1 + $0x20] sm:$0xff]
      %v235 = vld [vmem:[%s1 + $0x28] sm:$0xff]
      %v236 = vld [vmem:[%s1 + $0x30] sm:$0xff]
      %v237 = vld [vmem:[%s1 + $0x38] sm:$0xff]
      %v238 = vld [vmem:[%s1 + $0x40] sm:$0xff]
      %v247 = vunpack.c.l.b16 %v222
      %v248 = vunpack.c.l.b16 %v223
      %v249 = vunpack.c.l.b16 %v224
      %v250 = vunpack.c.l.b16 %v225
      %v251 = vunpack.c.l.b16 %v226
      %v252 = vunpack.c.l.b16 %v227
      %v253 = vunpack.c.l.b16 %v228
      %v254 = vunpack.c.l.b16 %v229
      %v255 = vpack.c.b16 %v248, %v247
      %v256 = vpack.c.b16 %v250, %v249
      %v257 = vpack.c.b16 %v252, %v251
      %v258 = vpack.c.b16 %v254, %v253
      %v268 = vunpack.c.l.b16 %v230
      %v269 = vunpack.c.h.b16 %v230
      %v270 = vunpack.c.l.b16 %v231
      %v271 = vunpack.c.h.b16 %v231
      %v272 = vunpack.c.l.b16 %v232
      %v273 = vunpack.c.h.b16 %v232
      %v274 = vunpack.c.l.b16 %v233
      %v275 = vunpack.c.h.b16 %v233
      %v276 = vunpack.c.l.b16 %v234
      %v277 = vunpack.c.h.b16 %v234
      %v278 = vunpack.c.l.b16 %v235
      %v279 = vunpack.c.h.b16 %v235
      %v280 = vunpack.c.l.b16 %v236
      %v281 = vunpack.c.h.b16 %v236
      %v282 = vunpack.c.l.b16 %v237
      %v283 = vunpack.c.h.b16 %v237
      %v284 = vunpack.c.l.b16 %v238
      %v285 = vunpack.c.h.b16 %v238
      %v286 = vpack.c.b16 %v270, %v268
      %v287 = vpack.c.b16 %v271, %v269
      %v288 = vpack.c.b16 %v274, %v272
      %v289 = vpack.c.b16 %v275, %v273
      %v290 = vpack.c.b16 %v278, %v276
      %v291 = vpack.c.b16 %v279, %v277
      %v292 = vpack.c.b16 %v282, %v280
      %v293 = vpack.c.b16 %v283, %v281
      %v294 = vpack.c.b16 %v284, %v284
      %v295 = vpack.c.b16 %v285, %v285
      %vm304 = vcmask 588800
      %v306 = vsel %vm304, %v255, 0
      %v309 = vsel %vm304, %v256, 0
      %v312 = vsel %vm304, %v257, 0
      %v315 = vsel %vm304, %v258, 0
      %vm317 = vcmask 1043456
      %v319 = vsel %vm317, %v294, 0
      %v322 = vsel %vm317, %v295, 0
      %324 = vmatpush.bf16.msra.mxu0 0
      %325 = vmatpush.bf16.msra.mxu0 0
      %326 = vmatpush.bf16.msra.mxu0 0
      %327 = vmatpush.bf16.msra.mxu0 %v319
      %328 = vmatpush.bf16.msra.mxu0 %v292
      %329 = vmatpush.bf16.msra.mxu0 %v290
      %330 = vmatpush.bf16.msra.mxu0 %v288
      %331 = vmatpush.bf16.msra.mxu0 %v286
      %332 = vmatmul.bf16.gmra.mxu0 %v306
      %v333 = vpop.f32.mrf.mxu0
      %v334 = vadd.f32 0.0, %v333
      %v335 = vpop.f32.mrf.mxu0
      %v336 = vadd.f32 0.0, %v335
      %337 = vmatmul.bf16.gmra.mxu0 %v309
      %v338 = vpop.f32.mrf.mxu0
      %v339 = vadd.f32 0.0, %v338
      %v340 = vpop.f32.mrf.mxu0
      %v341 = vadd.f32 0.0, %v340
      %342 = vmatmul.bf16.gmra.mxu0 %v312
      %v343 = vpop.f32.mrf.mxu0
      %v344 = vadd.f32 0.0, %v343
      %v345 = vpop.f32.mrf.mxu0
      %v346 = vadd.f32 0.0, %v345
      %347 = vmatmul.bf16.gmra.mxu0 %v315
      %v348 = vpop.f32.mrf.mxu0
      %v349 = vadd.f32 0.0, %v348
      %v350 = vpop.f32.mrf.mxu0
      %v351 = vadd.f32 0.0, %v350
      %352 = vdwg.mxu0
      %353 = vmatpush.bf16.msra.mxu0 0
      %354 = vmatpush.bf16.msra.mxu0 0
      %355 = vmatpush.bf16.msra.mxu0 0
      %356 = vmatpush.bf16.msra.mxu0 %v322
      %357 = vmatpush.bf16.msra.mxu0 %v293
      %358 = vmatpush.bf16.msra.mxu0 %v291
      %359 = vmatpush.bf16.msra.mxu0 %v289
      %360 = vmatpush.bf16.msra.mxu0 %v287
      %361 = vmatmul.bf16.gmra.mxu0 %v306
      %v362 = vpop.f32.mrf.mxu0
      %v363 = vadd.f32 0.0, %v362
      %v364 = vpop.f32.mrf.mxu0
      %v365 = vadd.f32 0.0, %v364
      %366 = vmatmul.bf16.gmra.mxu0 %v309
      %v367 = vpop.f32.mrf.mxu0
      %v368 = vadd.f32 0.0, %v367
      %v369 = vpop.f32.mrf.mxu0
      %v370 = vadd.f32 0.0, %v369
      %371 = vmatmul.bf16.gmra.mxu0 %v312
      %v372 = vpop.f32.mrf.mxu0
      %v373 = vadd.f32 0.0, %v372
      %v374 = vpop.f32.mrf.mxu0
      %v375 = vadd.f32 0.0, %v374
      %376 = vmatmul.bf16.gmra.mxu0 %v315
      %v377 = vpop.f32.mrf.mxu0
      %v378 = vadd.f32 0.0, %v377
      %v379 = vpop.f32.mrf.mxu0
      %v380 = vadd.f32 0.0, %v379
      %381 = vdwg.mxu0
      %v382 = vpack.c.bf16 %v334, %v334
      %v383 = vpack.c.bf16 %v336, %v336
      %v384 = vpack.c.bf16 %v339, %v339
      %v385 = vpack.c.bf16 %v341, %v341
      %v386 = vpack.c.bf16 %v344, %v344
      %v387 = vpack.c.bf16 %v346, %v346
      %v388 = vpack.c.bf16 %v349, %v349
      %v389 = vpack.c.bf16 %v351, %v351
      %390 = vst [vmem:[%s211] sm:$0xf] %v382
      %391 = vst [vmem:[%s211 + $0x4] sm:$0xf] %v383
      %392 = vst [vmem:[%s211 + $0x8] sm:$0xf] %v384
      %393 = vst [vmem:[%s211 + $0xc] sm:$0xf] %v385
      %394 = vst [vmem:[%s211 + $0x10] sm:$0xf] %v386
      %395 = vst [vmem:[%s211 + $0x14] sm:$0xf] %v387
      %396 = vst [vmem:[%s211 + $0x18] sm:$0xf] %v388
      %397 = vst [vmem:[%s211 + $0x1c] sm:$0xf] %v389
      %v398 = vpack.c.bf16 %v363, %v363
      %v399 = vpack.c.bf16 %v365, %v365
      %v400 = vpack.c.bf16 %v368, %v368
      %v401 = vpack.c.bf16 %v370, %v370
      %v402 = vpack.c.bf16 %v373, %v373
      %v403 = vpack.c.bf16 %v375, %v375
      %v404 = vpack.c.bf16 %v378, %v378
      %v405 = vpack.c.bf16 %v380, %v380
      %406 = vst [vmem:[%s216] sm:$0xf] %v398
      %407 = vst [vmem:[%s216 + $0x4] sm:$0xf] %v399
      %408 = vst [vmem:[%s216 + $0x8] sm:$0xf] %v400
      %409 = vst [vmem:[%s216 + $0xc] sm:$0xf] %v401
      %410 = vst [vmem:[%s216 + $0x10] sm:$0xf] %v402
      %411 = vst [vmem:[%s216 + $0x14] sm:$0xf] %v403
      %412 = vst [vmem:[%s216 + $0x18] sm:$0xf] %v404
      %413 = vst [vmem:[%s216 + $0x1c] sm:$0xf] %v405
      %v414 = vadd.f32 %v334, %v336
      %v415 = vadd.f32 %v414, %v339
      %v416 = vadd.f32 %v415, %v341
      %v417 = vadd.f32 %v416, %v344
      %v418 = vadd.f32 %v417, %v346
      %v419 = vadd.f32 %v418, %v349
      %v420 = vadd.f32 %v419, %v351
      %v421 = vrot.slane %v420, 4
      %v422 = vadd.f32 %v420, %v421
      %v423 = vrot.slane %v422, 2
      %v424 = vadd.f32 %v422, %v423
      %v425 = vrot.slane %v424, 1
      %v426 = vadd.f32 %v424, %v425
      %v427 = vmul.f32 %v426, 0.015625
      %v428 = vsub.f32 %v334, %v427
      %v429 = vsub.f32 %v336, %v427
      %v430 = vsub.f32 %v339, %v427
      %v431 = vsub.f32 %v341, %v427
      %v432 = vsub.f32 %v344, %v427
      %v433 = vsub.f32 %v346, %v427
      %v434 = vsub.f32 %v349, %v427
      %v435 = vsub.f32 %v351, %v427
      %v436 = vadd.f32 %v363, %v365
      %v437 = vadd.f32 %v436, %v368
      %v438 = vadd.f32 %v437, %v370
      %v439 = vadd.f32 %v438, %v373
      %v440 = vadd.f32 %v439, %v375
      %v441 = vadd.f32 %v440, %v378
      %v442 = vadd.f32 %v441, %v380
      %v443 = vrot.slane %v442, 4
      %v444 = vadd.f32 %v442, %v443
      %v445 = vrot.slane %v444, 2
      %v446 = vadd.f32 %v444, %v445
      %v447 = vrot.slane %v446, 1
      %v448 = vadd.f32 %v446, %v447
      %v449 = vmul.f32 %v448, 0.015625
      %v450 = vsub.f32 %v363, %v449
      %v451 = vsub.f32 %v365, %v449
      %v452 = vsub.f32 %v368, %v449
      %v453 = vsub.f32 %v370, %v449
      %v454 = vsub.f32 %v373, %v449
      %v455 = vsub.f32 %v375, %v449
      %v456 = vsub.f32 %v378, %v449
      %v457 = vsub.f32 %v380, %v449
      %458 = vst [vmem:[%s220] sm:$0x1] %v426
      %v459 = vmul.f32 %v428, %v428
      %v460 = vmul.f32 %v429, %v429
      %v461 = vmul.f32 %v430, %v430
      %v462 = vmul.f32 %v431, %v431
      %v463 = vmul.f32 %v432, %v432
      %v464 = vmul.f32 %v433, %v433
      %v465 = vmul.f32 %v434, %v434
      %v466 = vmul.f32 %v435, %v435
      %v467 = vadd.f32 %v459, %v460
      %v468 = vadd.f32 %v467, %v461
      %v469 = vadd.f32 %v468, %v462
      %v470 = vadd.f32 %v469, %v463
      %v471 = vadd.f32 %v470, %v464
      %v472 = vadd.f32 %v471, %v465
      %v473 = vadd.f32 %v472, %v466
      %v474 = vrot.slane %v473, 4
      %v475 = vadd.f32 %v473, %v474
      %v476 = vrot.slane %v475, 2
      %v477 = vadd.f32 %v475, %v476
      %v478 = vrot.slane %v477, 1
      %v479 = vadd.f32 %v477, %v478
      %480 = vst [vmem:[%s220 + $0x1] sm:$0x1] %v479
      %481 = vst [vmem:[%s220 + $0x2] sm:$0x1] %v448
      %v482 = vmul.f32 %v450, %v450
      %v483 = vmul.f32 %v451, %v451
      %v484 = vmul.f32 %v452, %v452
      %v485 = vmul.f32 %v453, %v453
      %v486 = vmul.f32 %v454, %v454
      %v487 = vmul.f32 %v455, %v455
      %v488 = vmul.f32 %v456, %v456
      %v489 = vmul.f32 %v457, %v457
      %v490 = vadd.f32 %v482, %v483
      %v491 = vadd.f32 %v490, %v484
      %v492 = vadd.f32 %v491, %v485
      %v493 = vadd.f32 %v492, %v486
      %v494 = vadd.f32 %v493, %v487
      %v495 = vadd.f32 %v494, %v488
      %v496 = vadd.f32 %v495, %v489
      %v497 = vrot.slane %v496, 4
      %v498 = vadd.f32 %v496, %v497
      %v499 = vrot.slane %v498, 2
      %v500 = vadd.f32 %v498, %v499
      %v501 = vrot.slane %v500, 1
      %v502 = vadd.f32 %v500, %v501
      %503 = vst [vmem:[%s220 + $0x3] sm:$0x1] %v502
      %504 = vst [vmem:[%s220 + $0x4] sm:$0xf] 0.0
      %p505 = scmp.lt.s32.totalorder %s16, 1
      %s506 = scalar_select %p505, %s16, 1
      %s507 = smul.addr %s506, 8
      %s508 = smul.addr %s507, 4
      %s509 = scalar_lea.vmem %s2, %s508
      %p510 = scmp.lt.s32.totalorder %s16, 1
      %s511 = scalar_select %p510, %s16, 1
      %s512 = smul.addr %s511, 8
      %s513 = smul.addr %s512, 4
      %s514 = scalar_lea.vmem %s3, %s513
      %p515 = scmp.lt.s32.totalorder %s16, 1
      %s516 = scalar_select %p515, %s16, 1
      %s517 = smul.addr %s516, 8
      %s518 = scalar_lea.vmem %s4, %s517
      // Predicated region
      $region29: #{_lambda_.3} parent=27 // pred_check
        %p519 = pneg %p81
      $region30: #{_lambda_.3} parent=27 // pred_check_branch
        %521 = sbr.rel (%p519) target = $region32
      $region31: #{_lambda_.3} parent=27 // pred_region
        _
      $region32: #{_lambda_.3} parent=27 // pred_fallthru
        _
      // Predicated region
      $region33: #{_lambda_.3} parent=27 // pred_check
        %p522 = pneg %p107
      $region34: #{_lambda_.3} parent=27 // pred_check_branch
        %524 = sbr.rel (%p522) target = $region36
      $region35: #{_lambda_.3} parent=27 // pred_region
        _
      $region36: #{_lambda_.3} parent=27 // pred_fallthru
        _
      // Predicated region
      $region37: #{_lambda_.3} parent=27 // pred_check
        %p525 = pneg %p133
      $region38: #{_lambda_.3} parent=27 // pred_check_branch
        %527 = sbr.rel (%p525) target = $region40
      $region39: #{_lambda_.3} parent=27 // pred_region
        _
      $region40: #{_lambda_.3} parent=27 // pred_fallthru
        _
    $region28: #{_lambda_.3} parent=5 // pred_fallthru
      _
    %p528 = scmp.le.s32.totalorder 2, %s11
    // Predicated region
    $region41: #{_lambda_.3} parent=5 // pred_check
      %p529 = pneg %p528
    $region42: #{_lambda_.3} parent=5 // pred_check_branch
      %531 = sbr.rel (%p529) target = $region44
    $region43: #{_lambda_.3} parent=5 // pred_region
      %s532 = ssub.s32 %s11, 2
      // Predicated region
      $region45: #{_lambda_.3} parent=43 // pred_check
        %p533 = pneg %p87
      $region46: #{_lambda_.3} parent=43 // pred_check_branch
        %535 = sbr.rel (%p533) target = $region48
      $region47: #{_lambda_.3} parent=43 // pred_region
        %p536 = scmp.lt.s32.totalorder %s17, 1
        %s537 = scalar_select %p536, %s17, 1
        %s538 = smul.addr %s537, 8
        %s539 = smul.addr %s538, 4
        %s540 = scalar_lea.vmem %s2, %s539
      $region48: #{_lambda_.3} parent=43 // pred_fallthru
        _
      // Predicated region
      $region49: #{_lambda_.3} parent=43 // pred_check
        %p541 = pneg %p113
      $region50: #{_lambda_.3} parent=43 // pred_check_branch
        %543 = sbr.rel (%p541) target = $region52
      $region51: #{_lambda_.3} parent=43 // pred_region
        %p544 = scmp.lt.s32.totalorder %s17, 1
        %s545 = scalar_select %p544, %s17, 1
        %s546 = smul.addr %s545, 8
        %s547 = smul.addr %s546, 4
        %s548 = scalar_lea.vmem %s3, %s547
      $region52: #{_lambda_.3} parent=43 // pred_fallthru
        _
      // Predicated region
      $region53: #{_lambda_.3} parent=43 // pred_check
        %p549 = pneg %p139
      $region54: #{_lambda_.3} parent=43 // pred_check_branch
        %551 = sbr.rel (%p549) target = $region56
      $region55: #{_lambda_.3} parent=43 // pred_region
        %p552 = scmp.lt.s32.totalorder %s17, 1
        %s553 = scalar_select %p552, %s17, 1
        %s554 = smul.addr %s553, 8
        %s555 = scalar_lea.vmem %s4, %s554
      $region56: #{_lambda_.3} parent=43 // pred_fallthru
        _
    $region44: #{_lambda_.3} parent=5 // pred_fallthru
      _
  $region6: #{_lambda_.3} parent=0 // loop_footer
    %s15 = sadd.s32 1, %s11
  $region7: #{_lambda_.3} parent=0 // loop_footer_branch
    %10 = sbr.rel target = $region3
  $region8: #{_lambda_.3} parent=0 // loop_exit
    _

// kernel: _lambda_.4
$region0: #{_lambda_.4}
  #allocation0 [shape = 'u32[]', space=smem, size = 0x4, offset = 0x4, fixed_abs, tag = 'smem constant byte address 0x4 - core index']
  #allocation1 [shape = 'u32[72,128]{1,0:T(1,128)}', space=vmem, size = 0x9000, scoped, tag = 'internal scratch']
  %s0 = inlined_call_operand.vmem [shape: bf16[2,64,128], index: 0, kind: input, shape index: {}]
  %s1 = inlined_call_operand.vmem [shape: f32[1,128], index: 1, kind: input, shape index: {}]
  %s2 = inlined_call_operand.vmem [shape: f32[1,128], index: 2, kind: input, shape index: {}]
  %s3 = inlined_call_operand.vmem [shape: bf16[9,128,128], index: 3, kind: input, shape index: {}]
  %s4 = inlined_call_operand.vmem [shape: bf16[2,64,128], index: 4, kind: output, shape index: {0}]
  %s5 = inlined_call_operand.vmem [shape: f32[16,128], index: 5, kind: output, shape index: {1}]
  %6 = xla_tuple %s4, %s5
  %s7 = sld [smem:[#allocation0]]
  $region57: #{_lambda_.4} parent=0
    _
  %s9 = ssub.s32 1, %s7
  %s10 = scalar_select 0, %s9, %s7
  loop: start=0, step=1, limit=4
  $region2: #{_lambda_.4} parent=0 // loop_pre_header
    _
  $region3: #{_lambda_.4} parent=0 // loop_header
    %s12 = sphi 0, %s16
    %p13 = scmp.ge.s32.totalorder %s12, 4
    %s22 = sphi 0, %s24
    %s25 = sphi 0, %s22
    %s26 = sphi 0, %s25
    %s42 = sphi 0, %s26
    %s46 = sphi 0, %s46
    %s48 = sphi 0, %s46
    %s49 = sphi 0, %s48
    %s63 = sphi 0, %s49
    %s67 = sphi 0, %s67
    %s69 = sphi 0, %s67
    %s70 = sphi 0, %s69
    %s84 = sphi 0, %s70
    %s88 = sphi 0, %s88
    %s90 = sphi 0, %s88
    %s91 = sphi 0, %s90
    %s105 = sphi 0, %s91
    %s111 = sphi 0, %s113
    %s114 = sphi 0, %s111
    %s115 = sphi 0, %s114
    %s131 = sphi 0, %s115
    %s137 = sphi 0, %s139
    %s140 = sphi 0, %s137
    %s141 = sphi 0, %s140
    %s157 = sphi 0, %s141
  $region4: #{_lambda_.4} parent=0 // loop_header_branch
    %15 = sbr.rel (%p13) target = $region8
  $region5: #{_lambda_.4} parent=0 // loop_body
    %s17 = ssub.s32 %s12, 1
    %s18 = ssub.s32 %s12, 2
    %s19 = sadd.s32 %s12, 1
    %s20 = ssub.s32 %s12, %s19
    %p21 = scmp.eq.s32.totalorder %s20, 0
    %s23 = sadd.s32 %s22, 1
    %s24 = scalar_select %p21, %s22, %s23
    %p27 = pneg %p21
    %p28 = scmp.eq.s32.totalorder %s12, 1
    %p29 = por %p27, %p28
    %p30 = scmp.ne.s32.totalorder %s22, %s25
    %p31 = scmp.eq.s32.totalorder %s12, 0
    %p32 = por %p30, %p31
    %p33 = scmp.ne.s32.totalorder %s22, %s25
    %p34 = scmp.eq.s32.totalorder %s17, 1
    %p35 = por %p33, %p34
    %p36 = scmp.ne.s32.totalorder %s25, %s26
    %p37 = scmp.eq.s32.totalorder %s17, 0
    %p38 = por %p36, %p37
    %p39 = scmp.ne.s32.totalorder %s25, %s26
    %p40 = scmp.eq.s32.totalorder %s18, 1
    %p41 = por %p39, %p40
    %p43 = scmp.ne.s32.totalorder %s26, %s42
    %p44 = scmp.eq.s32.totalorder %s18, 0
    %p45 = por %p43, %p44
    %s47 = sadd.s32 %s46, 1
    %p50 = scmp.eq.s32.totalorder %s12, 1
    %p51 = scmp.ne.s32.totalorder %s46, %s48
    %p52 = scmp.eq.s32.totalorder %s12, 0
    %p53 = por %p51, %p52
    %p54 = scmp.ne.s32.totalorder %s46, %s48
    %p55 = scmp.eq.s32.totalorder %s17, 1
    %p56 = por %p54, %p55
    %p57 = scmp.ne.s32.totalorder %s48, %s49
    %p58 = scmp.eq.s32.totalorder %s17, 0
    %p59 = por %p57, %p58
    %p60 = scmp.ne.s32.totalorder %s48, %s49
    %p61 = scmp.eq.s32.totalorder %s18, 1
    %p62 = por %p60, %p61
    %p64 = scmp.ne.s32.totalorder %s49, %s63
    %p65 = scmp.eq.s32.totalorder %s18, 0
    %p66 = por %p64, %p65
    %s68 = sadd.s32 %s67, 1
    %p71 = scmp.eq.s32.totalorder %s12, 1
    %p72 = scmp.ne.s32.totalorder %s67, %s69
    %p73 = scmp.eq.s32.totalorder %s12, 0
    %p74 = por %p72, %p73
    %p75 = scmp.ne.s32.totalorder %s67, %s69
    %p76 = scmp.eq.s32.totalorder %s17, 1
    %p77 = por %p75, %p76
    %p78 = scmp.ne.s32.totalorder %s69, %s70
    %p79 = scmp.eq.s32.totalorder %s17, 0
    %p80 = por %p78, %p79
    %p81 = scmp.ne.s32.totalorder %s69, %s70
    %p82 = scmp.eq.s32.totalorder %s18, 1
    %p83 = por %p81, %p82
    %p85 = scmp.ne.s32.totalorder %s70, %s84
    %p86 = scmp.eq.s32.totalorder %s18, 0
    %p87 = por %p85, %p86
    %s89 = sadd.s32 %s88, 1
    %p92 = scmp.eq.s32.totalorder %s12, 1
    %p93 = scmp.ne.s32.totalorder %s88, %s90
    %p94 = scmp.eq.s32.totalorder %s12, 0
    %p95 = por %p93, %p94
    %p96 = scmp.ne.s32.totalorder %s88, %s90
    %p97 = scmp.eq.s32.totalorder %s17, 1
    %p98 = por %p96, %p97
    %p99 = scmp.ne.s32.totalorder %s90, %s91
    %p100 = scmp.eq.s32.totalorder %s17, 0
    %p101 = por %p99, %p100
    %p102 = scmp.ne.s32.totalorder %s90, %s91
    %p103 = scmp.eq.s32.totalorder %s18, 1
    %p104 = por %p102, %p103
    %p106 = scmp.ne.s32.totalorder %s91, %s105
    %p107 = scmp.eq.s32.totalorder %s18, 0
    %p108 = por %p106, %p107
    %s109 = ssub.s32 %s12, %s19
    %p110 = scmp.eq.s32.totalorder %s109, 0
    %s112 = sadd.s32 %s111, 1
    %s113 = scalar_select %p110, %s111, %s112
    %p116 = pneg %p110
    %p117 = scmp.eq.s32.totalorder %s12, 1
    %p118 = por %p116, %p117
    %p119 = scmp.ne.s32.totalorder %s111, %s114
    %p120 = scmp.eq.s32.totalorder %s12, 0
    %p121 = por %p119, %p120
    %p122 = scmp.ne.s32.totalorder %s111, %s114
    %p123 = scmp.eq.s32.totalorder %s17, 1
    %p124 = por %p122, %p123
    %p125 = scmp.ne.s32.totalorder %s114, %s115
    %p126 = scmp.eq.s32.totalorder %s17, 0
    %p127 = por %p125, %p126
    %p128 = scmp.ne.s32.totalorder %s114, %s115
    %p129 = scmp.eq.s32.totalorder %s18, 1
    %p130 = por %p128, %p129
    %p132 = scmp.ne.s32.totalorder %s115, %s131
    %p133 = scmp.eq.s32.totalorder %s18, 0
    %p134 = por %p132, %p133
    %s135 = ssub.s32 %s12, %s19
    %p136 = scmp.eq.s32.totalorder %s135, 0
    %s138 = sadd.s32 %s137, 1
    %s139 = scalar_select %p136, %s137, %s138
    %p142 = pneg %p136
    %p143 = scmp.eq.s32.totalorder %s12, 1
    %p144 = por %p142, %p143
    %p145 = scmp.ne.s32.totalorder %s137, %s140
    %p146 = scmp.eq.s32.totalorder %s12, 0
    %p147 = por %p145, %p146
    %p148 = scmp.ne.s32.totalorder %s137, %s140
    %p149 = scmp.eq.s32.totalorder %s17, 1
    %p150 = por %p148, %p149
    %p151 = scmp.ne.s32.totalorder %s140, %s141
    %p152 = scmp.eq.s32.totalorder %s17, 0
    %p153 = por %p151, %p152
    %p154 = scmp.ne.s32.totalorder %s140, %s141
    %p155 = scmp.eq.s32.totalorder %s18, 1
    %p156 = por %p154, %p155
    %p158 = scmp.ne.s32.totalorder %s141, %s157
    %p159 = scmp.eq.s32.totalorder %s18, 0
    %p160 = por %p158, %p159
    %p161 = scmp.le.s32.totalorder 1, %s12
    %p162 = scmp.lt.s32.totalorder %s12, 3
    %p163 = pnand %p161, %p162
    %p164 = pneg %p163
    // Predicated region
    $region9: #{_lambda_.4} parent=5 // pred_check
      _
    $region10: #{_lambda_.4} parent=5 // pred_check_branch
      %166 = sbr.rel (%p163) target = $region12
    $region11: #{_lambda_.4} parent=5 // pred_region
      %s167 = ssub.s32 %s12, 1
      // Predicated region
      $region13: #{_lambda_.4} parent=11 // pred_check
        %p168 = pneg %p59
      $region14: #{_lambda_.4} parent=11 // pred_check_branch
        %170 = sbr.rel (%p168) target = $region16
      $region15: #{_lambda_.4} parent=11 // pred_region
        _
      $region16: #{_lambda_.4} parent=11 // pred_fallthru
        _
      // Predicated region
      $region17: #{_lambda_.4} parent=11 // pred_check
        %p171 = pneg %p80
      $region18: #{_lambda_.4} parent=11 // pred_check_branch
        %173 = sbr.rel (%p171) target = $region20
      $region19: #{_lambda_.4} parent=11 // pred_region
        _
      $region20: #{_lambda_.4} parent=11 // pred_fallthru
        _
      // Predicated region
      $region21: #{_lambda_.4} parent=11 // pred_check
        %p174 = pneg %p101
      $region22: #{_lambda_.4} parent=11 // pred_check_branch
        %176 = sbr.rel (%p174) target = $region24
      $region23: #{_lambda_.4} parent=11 // pred_region
        _
      $region24: #{_lambda_.4} parent=11 // pred_fallthru
        _
    $region12: #{_lambda_.4} parent=5 // pred_fallthru
      _
    %p177 = scmp.lt.s32.totalorder %s12, 2
    // Predicated region
    $region25: #{_lambda_.4} parent=5 // pred_check
      %p178 = pneg %p177
    $region26: #{_lambda_.4} parent=5 // pred_check_branch
      %180 = sbr.rel (%p178) target = $region28
    $region27: #{_lambda_.4} parent=5 // pred_region
      // Predicated region
      $region29: #{_lambda_.4} parent=27 // pred_check
        %p181 = pneg %p32
      $region30: #{_lambda_.4} parent=27 // pred_check_branch
        %183 = sbr.rel (%p181) target = $region32
      $region31: #{_lambda_.4} parent=27 // pred_region
        %p184 = scmp.lt.s32.totalorder %s12, 1
        %s185 = scalar_select %p184, %s12, 1
        %s186 = smul.addr %s185, 8
        %s187 = smul.addr %s186, 4
        %s188 = scalar_lea.vmem %s0, %s187
      $region32: #{_lambda_.4} parent=27 // pred_fallthru
        _
    $region28: #{_lambda_.4} parent=5 // pred_fallthru
      _
    %p189 = scmp.le.s32.totalorder 1, %s12
    %p190 = scmp.lt.s32.totalorder %s12, 3
    %p191 = pnand %p189, %p190
    %p192 = pneg %p191
    // Predicated region
    $region33: #{_lambda_.4} parent=5 // pred_check
      _
    $region34: #{_lambda_.4} parent=5 // pred_check_branch
      %194 = sbr.rel (%p191) target = $region36
    $region35: #{_lambda_.4} parent=5 // pred_region
      %s195 = ssub.s32 %s12, 1
      %p196 = scmp.lt.s32.totalorder %s17, 1
      %s197 = scalar_select %p196, %s17, 1
      %s198 = smul.addr %s197, 8
      %s199 = smul.addr %s198, 4
      %s200 = scalar_lea.vmem %s0, %s199
      %p201 = pneg %p38
      %p202 = pneg %p35
      %p203 = pneg %p59
      %p204 = pneg %p56
      %p205 = pneg %p80
      %p206 = pneg %p77
      %p207 = pneg %p101
      %p208 = pneg %p98
      %p209 = pneg %p127
      %p210 = pneg %p124
      %p211 = scmp.lt.s32.totalorder %s17, 1
      %s212 = scalar_select %p211, %s17, 1
      %s213 = smul.addr %s212, 8
      %s214 = smul.addr %s213, 4
      %s215 = scalar_lea.vmem %s4, %s214
      %p216 = pneg %p153
      %p217 = pneg %p150
      %p218 = scmp.lt.s32.totalorder %s17, 1
      %s219 = scalar_select %p218, %s17, 1
      %s220 = smul.addr %s219, 8
      %s221 = scalar_lea.vmem %s5, %s220
      %p222 = scmp.lt.s32.totalorder %s17, 1
      %s223 = scalar_select %p222, %s17, 1
      %s224 = smul.addr %s223, 8
      %s225 = smul.addr %s224, 4
      %s226 = scalar_lea.vmem %s0, %s225
      %p227 = scmp.lt.s32.totalorder %s17, 1
      %s228 = scalar_select %p227, %s17, 1
      %s229 = smul.addr %s228, 8
      %s230 = smul.addr %s229, 4
      %s231 = scalar_lea.vmem %s4, %s230
      %p232 = scmp.lt.s32.totalorder %s17, 1
      %s233 = scalar_select %p232, %s17, 1
      %s234 = smul.addr %s233, 8
      %s235 = scalar_lea.vmem %s5, %s234
      %v237 = vld [vmem:[%s226] sm:$0xf]
      %v238 = vld [vmem:[%s226 + $0x4] sm:$0xf]
      %v239 = vld [vmem:[%s226 + $0x8] sm:$0xf]
      %v240 = vld [vmem:[%s226 + $0xc] sm:$0xf]
      %v241 = vld [vmem:[%s226 + $0x10] sm:$0xf]
      %v242 = vld [vmem:[%s226 + $0x14] sm:$0xf]
      %v243 = vld [vmem:[%s226 + $0x18] sm:$0xf]
      %v244 = vld [vmem:[%s226 + $0x1c] sm:$0xf]
      %v245 = vunpack.c.l.bf16 %v237
      %v246 = vunpack.c.l.bf16 %v238
      %v247 = vunpack.c.l.bf16 %v239
      %v248 = vunpack.c.l.bf16 %v240
      %v249 = vunpack.c.l.bf16 %v241
      %v250 = vunpack.c.l.bf16 %v242
      %v251 = vunpack.c.l.bf16 %v243
      %v252 = vunpack.c.l.bf16 %v244
      %v253 = vld [vmem:[%s1] sm:$0x1]
      %v255 = vperm.slane %v253, 0
      %v257 = vmul.f32 %v245, %v255
      %v258 = vmul.f32 %v246, %v255
      %v259 = vmul.f32 %v247, %v255
      %v260 = vmul.f32 %v248, %v255
      %v261 = vmul.f32 %v249, %v255
      %v262 = vmul.f32 %v250, %v255
      %v263 = vmul.f32 %v251, %v255
      %v264 = vmul.f32 %v252, %v255
      %v265 = vld [vmem:[%s2] sm:$0x1]
      %v267 = vperm.slane %v265, 0
      %v269 = vadd.f32 %v257, %v267
      %v270 = vadd.f32 %v258, %v267
      %v271 = vadd.f32 %v259, %v267
      %v272 = vadd.f32 %v260, %v267
      %v273 = vadd.f32 %v261, %v267
      %v274 = vadd.f32 %v262, %v267
      %v275 = vadd.f32 %v263, %v267
      %v276 = vadd.f32 %v264, %v267
      %vm277 = vcmp.gt.f32.partialorder %v269, 0.0
      %vm278 = vcmp.gt.f32.partialorder %v270, 0.0
      %vm279 = vcmp.gt.f32.partialorder %v271, 0.0
      %vm280 = vcmp.gt.f32.partialorder %v272, 0.0
      %vm281 = vcmp.gt.f32.partialorder %v273, 0.0
      %vm282 = vcmp.gt.f32.partialorder %v274, 0.0
      %vm283 = vcmp.gt.f32.partialorder %v275, 0.0
      %vm284 = vcmp.gt.f32.partialorder %v276, 0.0
      %v285 = vmul.f32 %v269, 0.1
      %v286 = vmul.f32 %v270, 0.1
      %v287 = vmul.f32 %v271, 0.1
      %v288 = vmul.f32 %v272, 0.1
      %v289 = vmul.f32 %v273, 0.1
      %v290 = vmul.f32 %v274, 0.1
      %v291 = vmul.f32 %v275, 0.1
      %v292 = vmul.f32 %v276, 0.1
      %v293 = vsel %vm277, %v269, %v285
      %v294 = vsel %vm278, %v270, %v286
      %v295 = vsel %vm279, %v271, %v287
      %v296 = vsel %vm280, %v272, %v288
      %v297 = vsel %vm281, %v273, %v289
      %v298 = vsel %vm282, %v274, %v290
      %v299 = vsel %vm283, %v275, %v291
      %v300 = vsel %vm284, %v276, %v292
      %v301 = vpack.c.bf16 %v293, %v293
      %v302 = vpack.c.bf16 %v294, %v294
      %v303 = vpack.c.bf16 %v295, %v295
      %v304 = vpack.c.bf16 %v296, %v296
      %v305 = vpack.c.bf16 %v297, %v297
      %v306 = vpack.c.bf16 %v298, %v298
      %v307 = vpack.c.bf16 %v299, %v299
      %v308 = vpack.c.bf16 %v300, %v300
      %v310 = vshrl.u32 0, 16
      %v312 = vrot.slane %v310, 7
      %v313 = vshll.u32 0, 16
      %v315 = vor.u32 %v312, %v313
      %v317 = vshrl.u32 %v301, 16
      %v319 = vrot.slane %v317, 7
      %v320 = vshll.u32 %v301, 16
      %v322 = vor.u32 %v319, %v320
      %v324 = vshrl.u32 %v302, 16
      %v326 = vrot.slane %v324, 7
      %v327 = vshll.u32 %v302, 16
      %v329 = vor.u32 %v326, %v327
      %v331 = vshrl.u32 %v303, 16
      %v333 = vrot.slane %v331, 7
      %v334 = vshll.u32 %v303, 16
      %v336 = vor.u32 %v333, %v334
      %v338 = vshrl.u32 %v304, 16
      %v340 = vrot.slane %v338, 7
      %v341 = vshll.u32 %v304, 16
      %v343 = vor.u32 %v340, %v341
      %v345 = vshrl.u32 %v305, 16
      %v347 = vrot.slane %v345, 7
      %v348 = vshll.u32 %v305, 16
      %v350 = vor.u32 %v347, %v348
      %v352 = vshrl.u32 %v306, 16
      %v354 = vrot.slane %v352, 7
      %v355 = vshll.u32 %v306, 16
      %v357 = vor.u32 %v354, %v355
      %v359 = vshrl.u32 %v307, 16
      %v361 = vrot.slane %v359, 7
      %v362 = vshll.u32 %v307, 16
      %v364 = vor.u32 %v361, %v362
      %v366 = vshrl.u32 %v308, 16
      %v368 = vrot.slane %v366, 7
      %v369 = vshll.u32 %v308, 16
      %v371 = vor.u32 %v368, %v369
      %vm381 = vcmask 1040384
      %vm382 = vsmask.f32 256
      %vm383 = vmand %vm381, %vm382
      %v384 = vsel %vm383, 0, %v315
      %v385 = vsel %vm383, 0, %v322
      %v386 = vsel %vm383, 0, %v329
      %v387 = vsel %vm383, 0, %v336
      %v388 = vsel %vm383, 0, %v343
      %v389 = vsel %vm383, 0, %v350
      %v390 = vsel %vm383, 0, %v357
      %v391 = vsel %vm383, 0, %v364
      %v392 = vsel %vm383, 0, %v371
      %vm393 = vcmask 1044480
      %vm394 = vsmask.f32 4352
      %vm395 = vmand %vm393, %vm394
      %v396 = vsel %vm395, %v384, 0
      %v397 = vsel %vm395, %v385, 0
      %v398 = vsel %vm395, %v386, 0
      %v399 = vsel %vm395, %v387, 0
      %v400 = vsel %vm395, %v388, 0
      %v401 = vsel %vm395, %v389, 0
      %v402 = vsel %vm395, %v390, 0
      %v403 = vsel %vm395, %v391, 0
      %v404 = vsel %vm395, %v392, 0
      %v405 = vld [vmem:[%s3] sm:$0xf]
      %v406 = vld [vmem:[%s3 + $0x4] sm:$0xf]
      %v407 = vld [vmem:[%s3 + $0x8] sm:$0xf]
      %v408 = vld [vmem:[%s3 + $0xc] sm:$0xf]
      %v409 = vld [vmem:[%s3 + $0x10] sm:$0xf]
      %v410 = vld [vmem:[%s3 + $0x14] sm:$0xf]
      %v411 = vld [vmem:[%s3 + $0x18] sm:$0xf]
      %v412 = vld [vmem:[%s3 + $0x1c] sm:$0xf]
      %v413 = vld [vmem:[%s3 + $0x20] sm:$0xf]
      %v414 = vld [vmem:[%s3 + $0x24] sm:$0xf]
      %v415 = vld [vmem:[%s3 + $0x28] sm:$0xf]
      %v416 = vld [vmem:[%s3 + $0x2c] sm:$0xf]
      %v417 = vld [vmem:[%s3 + $0x30] sm:$0xf]
      %v418 = vld [vmem:[%s3 + $0x34] sm:$0xf]
      %v419 = vld [vmem:[%s3 + $0x38] sm:$0xf]
      %v420 = vld [vmem:[%s3 + $0x3c] sm:$0xf]
      %v429 = vunpack.c.l.b16 %v396
      %v430 = vunpack.c.h.b16 %v396
      %v431 = vunpack.c.l.b16 %v397
      %v432 = vunpack.c.h.b16 %v397
      %v433 = vunpack.c.l.b16 %v398
      %v434 = vunpack.c.h.b16 %v398
      %v435 = vunpack.c.l.b16 %v399
      %v436 = vunpack.c.h.b16 %v399
      %v437 = vunpack.c.l.b16 %v400
      %v438 = vunpack.c.h.b16 %v400
      %v439 = vunpack.c.l.b16 %v401
      %v440 = vunpack.c.h.b16 %v401
      %v441 = vunpack.c.l.b16 %v402
      %v442 = vunpack.c.h.b16 %v402
      %v443 = vunpack.c.l.b16 %v403
      %v444 = vunpack.c.h.b16 %v403
      %v445 = vpack.c.b16 %v429, %v429
      %v446 = vpack.c.b16 %v430, %v430
      %v447 = vpack.c.b16 %v431, %v431
      %v448 = vpack.c.b16 %v432, %v432
      %v449 = vpack.c.b16 %v433, %v433
      %v450 = vpack.c.b16 %v434, %v434
      %v451 = vpack.c.b16 %v435, %v435
      %v452 = vpack.c.b16 %v436, %v436
      %v453 = vpack.c.b16 %v437, %v437
      %v454 = vpack.c.b16 %v438, %v438
      %v455 = vpack.c.b16 %v439, %v439
      %v456 = vpack.c.b16 %v440, %v440
      %v457 = vpack.c.b16 %v441, %v441
      %v458 = vpack.c.b16 %v442, %v442
      %v459 = vpack.c.b16 %v443, %v443
      %v460 = vpack.c.b16 %v444, %v444
      %vm461 = vsmask.f32 3328
      %vm462 = vsmask.f32 7440
      %vm463 = vmor %vm461, %vm462
      %v465 = vshrl.u32 %v445, 16
      %v467 = vrot.slane %v465, 4
      %v468 = vshll.u32 %v445, 16
      %v470 = vrot.slane %v468, 5
      %v471 = vor.u32 %v467, %v470
      %v472 = vrot.slane %v471, 4
      %v474 = vshll.u32 %v446, 16
      %v476 = vrot.slane %v474, 5
      %v477 = vsel %vm463, %v472, %v476
      %v479 = vshrl.u32 %v447, 16
      %v481 = vrot.slane %v479, 4
      %v482 = vshll.u32 %v447, 16
      %v484 = vrot.slane %v482, 5
      %v485 = vor.u32 %v481, %v484
      %v486 = vrot.slane %v485, 4
      %v488 = vshll.u32 %v448, 16
      %v490 = vrot.slane %v488, 5
      %v491 = vsel %vm463, %v486, %v490
      %v493 = vshrl.u32 %v449, 16
      %v495 = vrot.slane %v493, 4
      %v496 = vshll.u32 %v449, 16
      %v498 = vrot.slane %v496, 5
      %v499 = vor.u32 %v495, %v498
      %v500 = vrot.slane %v499, 4
      %v502 = vshll.u32 %v450, 16
      %v504 = vrot.slane %v502, 5
      %v505 = vsel %vm463, %v500, %v504
      %v507 = vshrl.u32 %v451, 16
      %v509 = vrot.slane %v507, 4
      %v510 = vshll.u32 %v451, 16
      %v512 = vrot.slane %v510, 5
      %v513 = vor.u32 %v509, %v512
      %v514 = vrot.slane %v513, 4
      %v516 = vshll.u32 %v452, 16
      %v518 = vrot.slane %v516, 5
      %v519 = vsel %vm463, %v514, %v518
      %v521 = vshrl.u32 %v453, 16
      %v523 = vrot.slane %v521, 4
      %v524 = vshll.u32 %v453, 16
      %v526 = vrot.slane %v524, 5
      %v527 = vor.u32 %v523, %v526
      %v528 = vrot.slane %v527, 4
      %v530 = vshll.u32 %v454, 16
      %v532 = vrot.slane %v530, 5
      %v533 = vsel %vm463, %v528, %v532
      %v535 = vshrl.u32 %v455, 16
      %v537 = vrot.slane %v535, 4
      %v538 = vshll.u32 %v455, 16
      %v540 = vrot.slane %v538, 5
      %v541 = vor.u32 %v537, %v540
      %v542 = vrot.slane %v541, 4
      %v544 = vshll.u32 %v456, 16
      %v546 = vrot.slane %v544, 5
      %v547 = vsel %vm463, %v542, %v546
      %v549 = vshrl.u32 %v457, 16
      %v551 = vrot.slane %v549, 4
      %v552 = vshll.u32 %v457, 16
      %v554 = vrot.slane %v552, 5
      %v555 = vor.u32 %v551, %v554
      %v556 = vrot.slane %v555, 4
      %v558 = vshll.u32 %v458, 16
      %v560 = vrot.slane %v558, 5
      %v561 = vsel %vm463, %v556, %v560
      %v563 = vshrl.u32 %v459, 16
      %v565 = vrot.slane %v563, 4
      %v566 = vshll.u32 %v459, 16
      %v568 = vrot.slane %v566, 5
      %v569 = vor.u32 %v565, %v568
      %v570 = vrot.slane %v569, 4
      %v572 = vshll.u32 %v460, 16
      %v574 = vrot.slane %v572, 5
      %v575 = vsel %vm463, %v570, %v574
      %s576 = scalar_lea.vmem %s3, 64
      %v577 = vld [vmem:[%s576] sm:$0xf]
      %v578 = vld [vmem:[%s576 + $0x4] sm:$0xf]
      %v579 = vld [vmem:[%s576 + $0x8] sm:$0xf]
      %v580 = vld [vmem:[%s576 + $0xc] sm:$0xf]
      %v581 = vld [vmem:[%s576 + $0x10] sm:$0xf]
      %v582 = vld [vmem:[%s576 + $0x14] sm:$0xf]
      %v583 = vld [vmem:[%s576 + $0x18] sm:$0xf]
      %v584 = vld [vmem:[%s576 + $0x1c] sm:$0xf]
      %v585 = vld [vmem:[%s576 + $0x20] sm:$0xf]
      %v586 = vld [vmem:[%s576 + $0x24] sm:$0xf]
      %v587 = vld [vmem:[%s576 + $0x28] sm:$0xf]
      %v588 = vld [vmem:[%s576 + $0x2c] sm:$0xf]
      %v589 = vld [vmem:[%s576 + $0x30] sm:$0xf]
      %v590 = vld [vmem:[%s576 + $0x34] sm:$0xf]
      %v591 = vld [vmem:[%s576 + $0x38] sm:$0xf]
      %v592 = vld [vmem:[%s576 + $0x3c] sm:$0xf]
      %v593 = vunpack.c.l.b16 %v477
      %v594 = vunpack.c.l.b16 %v491
      %v595 = vunpack.c.l.b16 %v505
      %v596 = vunpack.c.l.b16 %v519
      %v597 = vunpack.c.l.b16 %v533
      %v598 = vunpack.c.l.b16 %v547
      %v599 = vunpack.c.l.b16 %v561
      %v600 = vunpack.c.l.b16 %v575
      %v601 = vpack.c.b16 %v594, %v593
      %v602 = vpack.c.b16 %v596, %v595
      %v603 = vpack.c.b16 %v598, %v597
      %v604 = vpack.c.b16 %v600, %v599
      %v625 = vunpack.c.l.b16 %v577
      %v626 = vunpack.c.l.b16 %v578
      %v627 = vunpack.c.l.b16 %v579
      %v628 = vunpack.c.l.b16 %v580
      %v629 = vunpack.c.l.b16 %v581
      %v630 = vunpack.c.l.b16 %v582
      %v631 = vunpack.c.l.b16 %v583
      %v632 = vunpack.c.l.b16 %v584
      %v633 = vunpack.c.l.b16 %v585
      %v634 = vunpack.c.l.b16 %v586
      %v635 = vunpack.c.l.b16 %v587
      %v636 = vunpack.c.l.b16 %v588
      %v637 = vunpack.c.l.b16 %v589
      %v638 = vunpack.c.l.b16 %v590
      %v639 = vunpack.c.l.b16 %v591
      %v640 = vunpack.c.l.b16 %v592
      %v641 = vpack.c.b16 %v626, %v625
      %v642 = vpack.c.b16 %v628, %v627
      %v643 = vpack.c.b16 %v630, %v629
      %v644 = vpack.c.b16 %v632, %v631
      %v645 = vpack.c.b16 %v634, %v633
      %v646 = vpack.c.b16 %v636, %v635
      %v647 = vpack.c.b16 %v638, %v637
      %v648 = vpack.c.b16 %v640, %v639
      %657 = vmatpush.bf16.msra.mxu0 %v648
      %658 = vmatpush.bf16.msra.mxu0 %v647
      %659 = vmatpush.bf16.msra.mxu0 %v646
      %660 = vmatpush.bf16.msra.mxu0 %v645
      %661 = vmatpush.bf16.msra.mxu0 %v644
      %662 = vmatpush.bf16.msra.mxu0 %v643
      %663 = vmatpush.bf16.msra.mxu0 %v642
      %664 = vmatpush.bf16.msra.mxu0 %v641
      %665 = vmatmul.bf16.gmra.mxu0 %v601
      %v666 = vpop.f32.mrf.mxu0
      %v667 = vadd.f32 0.0, %v666
      %v668 = vpop.f32.mrf.mxu0
      %v669 = vadd.f32 0.0, %v668
      %670 = vmatmul.bf16.gmra.mxu0 %v602
      %v671 = vpop.f32.mrf.mxu0
      %v672 = vadd.f32 0.0, %v671
      %v673 = vpop.f32.mrf.mxu0
      %v674 = vadd.f32 0.0, %v673
      %675 = vmatmul.bf16.gmra.mxu0 %v603
      %v676 = vpop.f32.mrf.mxu0
      %v677 = vadd.f32 0.0, %v676
      %v678 = vpop.f32.mrf.mxu0
      %v679 = vadd.f32 0.0, %v678
      %680 = vmatmul.bf16.gmra.mxu0 %v604
      %v681 = vpop.f32.mrf.mxu0
      %v682 = vadd.f32 0.0, %v681
      %v683 = vpop.f32.mrf.mxu0
      %v684 = vadd.f32 0.0, %v683
      %685 = vdwg.mxu0
      %v686 = vpack.c.b16 %v431, %v429
      %v687 = vpack.c.b16 %v435, %v433
      %v688 = vpack.c.b16 %v439, %v437
      %v689 = vpack.c.b16 %v443, %v441
      %v710 = vunpack.c.l.b16 %v405
      %v711 = vunpack.c.l.b16 %v406
      %v712 = vunpack.c.l.b16 %v407
      %v713 = vunpack.c.l.b16 %v408
      %v714 = vunpack.c.l.b16 %v409
      %v715 = vunpack.c.l.b16 %v410
      %v716 = vunpack.c.l.b16 %v411
      %v717 = vunpack.c.l.b16 %v412
      %v718 = vunpack.c.l.b16 %v413
      %v719 = vunpack.c.l.b16 %v414
      %v720 = vunpack.c.l.b16 %v415
      %v721 = vunpack.c.l.b16 %v416
      %v722 = vunpack.c.l.b16 %v417
      %v723 = vunpack.c.l.b16 %v418
      %v724 = vunpack.c.l.b16 %v419
      %v725 = vunpack.c.l.b16 %v420
      %v726 = vpack.c.b16 %v711, %v710
      %v727 = vpack.c.b16 %v713, %v712
      %v728 = vpack.c.b16 %v715, %v714
      %v729 = vpack.c.b16 %v717, %v716
      %v730 = vpack.c.b16 %v719, %v718
      %v731 = vpack.c.b16 %v721, %v720
      %v732 = vpack.c.b16 %v723, %v722
      %v733 = vpack.c.b16 %v725, %v724
      %742 = vmatpush.bf16.msra.mxu0 %v733
      %743 = vmatpush.bf16.msra.mxu0 %v732
      %744 = vmatpush.bf16.msra.mxu0 %v731
      %745 = vmatpush.bf16.msra.mxu0 %v730
      %746 = vmatpush.bf16.msra.mxu0 %v729
      %747 = vmatpush.bf16.msra.mxu0 %v728
      %748 = vmatpush.bf16.msra.mxu0 %v727
      %749 = vmatpush.bf16.msra.mxu0 %v726
      %750 = vmatmul.bf16.gmra.mxu0 %v686
      %v751 = vpop.f32.mrf.mxu0
      %v752 = vadd.f32 %v667, %v751
      %v753 = vpop.f32.mrf.mxu0
      %v754 = vadd.f32 %v669, %v753
      %755 = vmatmul.bf16.gmra.mxu0 %v687
      %v756 = vpop.f32.mrf.mxu0
      %v757 = vadd.f32 %v672, %v756
      %v758 = vpop.f32.mrf.mxu0
      %v759 = vadd.f32 %v674, %v758
      %760 = vmatmul.bf16.gmra.mxu0 %v688
      %v761 = vpop.f32.mrf.mxu0
      %v762 = vadd.f32 %v677, %v761
      %v763 = vpop.f32.mrf.mxu0
      %v764 = vadd.f32 %v679, %v763
      %765 = vmatmul.bf16.gmra.mxu0 %v689
      %v766 = vpop.f32.mrf.mxu0
      %v767 = vadd.f32 %v682, %v766
      %v768 = vpop.f32.mrf.mxu0
      %v769 = vadd.f32 %v684, %v768
      %770 = vdwg.mxu0
      %vm771 = vcmask 1042432
      %vm772 = vcmask 1046532
      %vm773 = vmor %vm771, %vm772
      %v774 = vrot.slane %v445, 5
      %v775 = vrot.slane %v774, 4
      %v776 = vrot.slane %v446, 5
      %v777 = vsel %vm773, %v775, %v776
      %v778 = vrot.slane %v447, 5
      %v779 = vrot.slane %v778, 4
      %v780 = vrot.slane %v448, 5
      %v781 = vsel %vm773, %v779, %v780
      %v782 = vrot.slane %v449, 5
      %v783 = vrot.slane %v782, 4
      %v784 = vrot.slane %v450, 5
      %v785 = vsel %vm773, %v783, %v784
      %v786 = vrot.slane %v451, 5
      %v787 = vrot.slane %v786, 4
      %v788 = vrot.slane %v452, 5
      %v789 = vsel %vm773, %v787, %v788
      %v790 = vrot.slane %v453, 5
      %v791 = vrot.slane %v790, 4
      %v792 = vrot.slane %v454, 5
      %v793 = vsel %vm773, %v791, %v792
      %v794 = vrot.slane %v455, 5
      %v795 = vrot.slane %v794, 4
      %v796 = vrot.slane %v456, 5
      %v797 = vsel %vm773, %v795, %v796
      %v798 = vrot.slane %v457, 5
      %v799 = vrot.slane %v798, 4
      %v800 = vrot.slane %v458, 5
      %v801 = vsel %vm773, %v799, %v800
      %v802 = vrot.slane %v459, 5
      %v803 = vrot.slane %v802, 4
      %v804 = vrot.slane %v460, 5
      %v805 = vsel %vm773, %v803, %v804
      %s806 = scalar_lea.vmem %s3, 128
      %v807 = vld [vmem:[%s806] sm:$0xf]
      %v808 = vld [vmem:[%s806 + $0x4] sm:$0xf]
      %v809 = vld [vmem:[%s806 + $0x8] sm:$0xf]
      %v810 = vld [vmem:[%s806 + $0xc] sm:$0xf]
      %v811 = vld [vmem:[%s806 + $0x10] sm:$0xf]
      %v812 = vld [vmem:[%s806 + $0x14] sm:$0xf]
      %v813 = vld [vmem:[%s806 + $0x18] sm:$0xf]
      %v814 = vld [vmem:[%s806 + $0x1c] sm:$0xf]
      %v815 = vld [vmem:[%s806 + $0x20] sm:$0xf]
      %v816 = vld [vmem:[%s806 + $0x24] sm:$0xf]
      %v817 = vld [vmem:[%s806 + $0x28] sm:$0xf]
      %v818 = vld [vmem:[%s806 + $0x2c] sm:$0xf]
      %v819 = vld [vmem:[%s806 + $0x30] sm:$0xf]
      %v820 = vld [vmem:[%s806 + $0x34] sm:$0xf]
      %v821 = vld [vmem:[%s806 + $0x38] sm:$0xf]
      %v822 = vld [vmem:[%s806 + $0x3c] sm:$0xf]
      %v823 = vunpack.c.l.b16 %v777
      %v824 = vunpack.c.l.b16 %v781
      %v825 = vunpack.c.l.b16 %v785
      %v826 = vunpack.c.l.b16 %v789
      %v827 = vunpack.c.l.b16 %v793
      %v828 = vunpack.c.l.b16 %v797
      %v829 = vunpack.c.l.b16 %v801
      %v830 = vunpack.c.l.b16 %v805
      %v831 = vpack.c.b16 %v824, %v823
      %v832 = vpack.c.b16 %v826, %v825
      %v833 = vpack.c.b16 %v828, %v827
      %v834 = vpack.c.b16 %v830, %v829
      %v855 = vunpack.c.l.b16 %v807
      %v856 = vunpack.c.l.b16 %v808
      %v857 = vunpack.c.l.b16 %v809
      %v858 = vunpack.c.l.b16 %v810
      %v859 = vunpack.c.l.b16 %v811
      %v860 = vunpack.c.l.b16 %v812
      %v861 = vunpack.c.l.b16 %v813
      %v862 = vunpack.c.l.b16 %v814
      %v863 = vunpack.c.l.b16 %v815
      %v864 = vunpack.c.l.b16 %v816
      %v865 = vunpack.c.l.b16 %v817
      %v866 = vunpack.c.l.b16 %v818
      %v867 = vunpack.c.l.b16 %v819
      %v868 = vunpack.c.l.b16 %v820
      %v869 = vunpack.c.l.b16 %v821
      %v870 = vunpack.c.l.b16 %v822
      %v871 = vpack.c.b16 %v856, %v855
      %v872 = vpack.c.b16 %v858, %v857
      %v873 = vpack.c.b16 %v860, %v859
      %v874 = vpack.c.b16 %v862, %v861
      %v875 = vpack.c.b16 %v864, %v863
      %v876 = vpack.c.b16 %v866, %v865
      %v877 = vpack.c.b16 %v868, %v867
      %v878 = vpack.c.b16 %v870, %v869
      %887 = vmatpush.bf16.msra.mxu0 %v878
      %888 = vmatpush.bf16.msra.mxu0 %v877
      %889 = vmatpush.bf16.msra.mxu0 %v876
      %890 = vmatpush.bf16.msra.mxu0 %v875
      %891 = vmatpush.bf16.msra.mxu0 %v874
      %892 = vmatpush.bf16.msra.mxu0 %v873
      %893 = vmatpush.bf16.msra.mxu0 %v872
      %894 = vmatpush.bf16.msra.mxu0 %v871
      %895 = vmatmul.bf16.gmra.mxu0 %v831
      %v896 = vpop.f32.mrf.mxu0
      %v897 = vadd.f32 0.0, %v896
      %v898 = vpop.f32.mrf.mxu0
      %v899 = vadd.f32 0.0, %v898
      %900 = vmatmul.bf16.gmra.mxu0 %v832
      %v901 = vpop.f32.mrf.mxu0
      %v902 = vadd.f32 0.0, %v901
      %v903 = vpop.f32.mrf.mxu0
      %v904 = vadd.f32 0.0, %v903
      %905 = vmatmul.bf16.gmra.mxu0 %v833
      %v906 = vpop.f32.mrf.mxu0
      %v907 = vadd.f32 0.0, %v906
      %v908 = vpop.f32.mrf.mxu0
      %v909 = vadd.f32 0.0, %v908
      %910 = vmatmul.bf16.gmra.mxu0 %v834
      %v911 = vpop.f32.mrf.mxu0
      %v912 = vadd.f32 0.0, %v911
      %v913 = vpop.f32.mrf.mxu0
      %v914 = vadd.f32 0.0, %v913
      %915 = vdwg.mxu0
      %v916 = vadd.f32 %v752, %v897
      %v917 = vadd.f32 %v754, %v899
      %v918 = vadd.f32 %v757, %v902
      %v919 = vadd.f32 %v759, %v904
      %v920 = vadd.f32 %v762, %v907
      %v921 = vadd.f32 %v764, %v909
      %v922 = vadd.f32 %v767, %v912
      %v923 = vadd.f32 %v769, %v914
      %s924 = scalar_lea.vmem %s3, 192
      %v925 = vld [vmem:[%s924] sm:$0xf]
      %v926 = vld [vmem:[%s924 + $0x4] sm:$0xf]
      %v927 = vld [vmem:[%s924 + $0x8] sm:$0xf]
      %v928 = vld [vmem:[%s924 + $0xc] sm:$0xf]
      %v929 = vld [vmem:[%s924 + $0x10] sm:$0xf]
      %v930 = vld [vmem:[%s924 + $0x14] sm:$0xf]
      %v931 = vld [vmem:[%s924 + $0x18] sm:$0xf]
      %v932 = vld [vmem:[%s924 + $0x1c] sm:$0xf]
      %v933 = vld [vmem:[%s924 + $0x20] sm:$0xf]
      %v934 = vld [vmem:[%s924 + $0x24] sm:$0xf]
      %v935 = vld [vmem:[%s924 + $0x28] sm:$0xf]
      %v936 = vld [vmem:[%s924 + $0x2c] sm:$0xf]
      %v937 = vld [vmem:[%s924 + $0x30] sm:$0xf]
      %v938 = vld [vmem:[%s924 + $0x34] sm:$0xf]
      %v939 = vld [vmem:[%s924 + $0x38] sm:$0xf]
      %v940 = vld [vmem:[%s924 + $0x3c] sm:$0xf]
      %v942 = vunpack.c.l.b16 %v404
      %v943 = vpack.c.b16 %v433, %v431
      %v944 = vpack.c.b16 %v437, %v435
      %v945 = vpack.c.b16 %v441, %v439
      %v946 = vpack.c.b16 %v942, %v443
      %v967 = vunpack.c.l.b16 %v925
      %v968 = vunpack.c.l.b16 %v926
      %v969 = vunpack.c.l.b16 %v927
      %v970 = vunpack.c.l.b16 %v928
      %v971 = vunpack.c.l.b16 %v929
      %v972 = vunpack.c.l.b16 %v930
      %v973 = vunpack.c.l.b16 %v931
      %v974 = vunpack.c.l.b16 %v932
      %v975 = vunpack.c.l.b16 %v933
      %v976 = vunpack.c.l.b16 %v934
      %v977 = vunpack.c.l.b16 %v935
      %v978 = vunpack.c.l.b16 %v936
      %v979 = vunpack.c.l.b16 %v937
      %v980 = vunpack.c.l.b16 %v938
      %v981 = vunpack.c.l.b16 %v939
      %v982 = vunpack.c.l.b16 %v940
      %v983 = vpack.c.b16 %v968, %v967
      %v984 = vpack.c.b16 %v970, %v969
      %v985 = vpack.c.b16 %v972, %v971
      %v986 = vpack.c.b16 %v974, %v973
      %v987 = vpack.c.b16 %v976, %v975
      %v988 = vpack.c.b16 %v978, %v977
      %v989 = vpack.c.b16 %v980, %v979
      %v990 = vpack.c.b16 %v982, %v981
      %999 = vmatpush.bf16.msra.mxu0 %v990
      %1000 = vmatpush.bf16.msra.mxu0 %v989
      %1001 = vmatpush.bf16.msra.mxu0 %v988
      %1002 = vmatpush.bf16.msra.mxu0 %v987
      %1003 = vmatpush.bf16.msra.mxu0 %v986
      %1004 = vmatpush.bf16.msra.mxu0 %v985
      %1005 = vmatpush.bf16.msra.mxu0 %v984
      %1006 = vmatpush.bf16.msra.mxu0 %v983
      %1007 = vmatmul.bf16.gmra.mxu0 %v943
      %v1008 = vpop.f32.mrf.mxu0
      %v1009 = vadd.f32 0.0, %v1008
      %v1010 = vpop.f32.mrf.mxu0
      %v1011 = vadd.f32 0.0, %v1010
      %1012 = vmatmul.bf16.gmra.mxu0 %v944
      %v1013 = vpop.f32.mrf.mxu0
      %v1014 = vadd.f32 0.0, %v1013
      %v1015 = vpop.f32.mrf.mxu0
      %v1016 = vadd.f32 0.0, %v1015
      %1017 = vmatmul.bf16.gmra.mxu0 %v945
      %v1018 = vpop.f32.mrf.mxu0
      %v1019 = vadd.f32 0.0, %v1018
      %v1020 = vpop.f32.mrf.mxu0
      %v1021 = vadd.f32 0.0, %v1020
      %1022 = vmatmul.bf16.gmra.mxu0 %v946
      %v1023 = vpop.f32.mrf.mxu0
      %v1024 = vadd.f32 0.0, %v1023
      %v1025 = vpop.f32.mrf.mxu0
      %v1026 = vadd.f32 0.0, %v1025
      %1027 = vdwg.mxu0
      %v1028 = vadd.f32 %v916, %v1009
      %v1029 = vadd.f32 %v917, %v1011
      %v1030 = vadd.f32 %v918, %v1014
      %v1031 = vadd.f32 %v919, %v1016
      %v1032 = vadd.f32 %v920, %v1019
      %v1033 = vadd.f32 %v921, %v1021
      %v1034 = vadd.f32 %v922, %v1024
      %v1035 = vadd.f32 %v923, %v1026
      %v1036 = vunpack.c.h.b16 %v404
      %v1037 = vpack.c.b16 %v942, %v942
      %v1038 = vpack.c.b16 %v1036, %v1036
      %v1040 = vshrl.u32 %v1037, 16
      %v1042 = vrot.slane %v1040, 4
      %v1043 = vshll.u32 %v1037, 16
      %v1045 = vrot.slane %v1043, 5
      %v1046 = vor.u32 %v1042, %v1045
      %v1047 = vrot.slane %v1046, 4
      %v1049 = vshll.u32 %v1038, 16
      %v1051 = vrot.slane %v1049, 5
      %v1052 = vsel %vm463, %v1047, %v1051
      %s1053 = scalar_lea.vmem %s3, 256
      %v1054 = vld [vmem:[%s1053] sm:$0xf]
      %v1055 = vld [vmem:[%s1053 + $0x4] sm:$0xf]
      %v1056 = vld [vmem:[%s1053 + $0x8] sm:$0xf]
      %v1057 = vld [vmem:[%s1053 + $0xc] sm:$0xf]
      %v1058 = vld [vmem:[%s1053 + $0x10] sm:$0xf]
      %v1059 = vld [vmem:[%s1053 + $0x14] sm:$0xf]
      %v1060 = vld [vmem:[%s1053 + $0x18] sm:$0xf]
      %v1061 = vld [vmem:[%s1053 + $0x1c] sm:$0xf]
      %v1062 = vld [vmem:[%s1053 + $0x20] sm:$0xf]
      %v1063 = vld [vmem:[%s1053 + $0x24] sm:$0xf]
      %v1064 = vld [vmem:[%s1053 + $0x28] sm:$0xf]
      %v1065 = vld [vmem:[%s1053 + $0x2c] sm:$0xf]
      %v1066 = vld [vmem:[%s1053 + $0x30] sm:$0xf]
      %v1067 = vld [vmem:[%s1053 + $0x34] sm:$0xf]
      %v1068 = vld [vmem:[%s1053 + $0x38] sm:$0xf]
      %v1069 = vld [vmem:[%s1053 + $0x3c] sm:$0xf]
      %v1070 = vunpack.c.l.b16 %v1052
      %v1071 = vpack.c.b16 %v595, %v594
      %v1072 = vpack.c.b16 %v597, %v596
      %v1073 = vpack.c.b16 %v599, %v598
      %v1074 = vpack.c.b16 %v1070, %v600
      %v1095 = vunpack.c.l.b16 %v1054
      %v1096 = vunpack.c.l.b16 %v1055
      %v1097 = vunpack.c.l.b16 %v1056
      %v1098 = vunpack.c.l.b16 %v1057
      %v1099 = vunpack.c.l.b16 %v1058
      %v1100 = vunpack.c.l.b16 %v1059
      %v1101 = vunpack.c.l.b16 %v1060
      %v1102 = vunpack.c.l.b16 %v1061
      %v1103 = vunpack.c.l.b16 %v1062
      %v1104 = vunpack.c.l.b16 %v1063
      %v1105 = vunpack.c.l.b16 %v1064
      %v1106 = vunpack.c.l.b16 %v1065
      %v1107 = vunpack.c.l.b16 %v1066
      %v1108 = vunpack.c.l.b16 %v1067
      %v1109 = vunpack.c.l.b16 %v1068
      %v1110 = vunpack.c.l.b16 %v1069
      %v1111 = vpack.c.b16 %v1096, %v1095
      %v1112 = vpack.c.b16 %v1098, %v1097
      %v1113 = vpack.c.b16 %v1100, %v1099
      %v1114 = vpack.c.b16 %v1102, %v1101
      %v1115 = vpack.c.b16 %v1104, %v1103
      %v1116 = vpack.c.b16 %v1106, %v1105
      %v1117 = vpack.c.b16 %v1108, %v1107
      %v1118 = vpack.c.b16 %v1110, %v1109
      %1127 = vmatpush.bf16.msra.mxu0 %v1118
      %1128 = vmatpush.bf16.msra.mxu0 %v1117
      %1129 = vmatpush.bf16.msra.mxu0 %v1116
      %1130 = vmatpush.bf16.msra.mxu0 %v1115
      %1131 = vmatpush.bf16.msra.mxu0 %v1114
      %1132 = vmatpush.bf16.msra.mxu0 %v1113
      %1133 = vmatpush.bf16.msra.mxu0 %v1112
      %1134 = vmatpush.bf16.msra.mxu0 %v1111
      %1135 = vmatmul.bf16.gmra.mxu0 %v1071
      %v1136 = vpop.f32.mrf.mxu0
      %v1137 = vadd.f32 0.0, %v1136
      %v1138 = vpop.f32.mrf.mxu0
      %v1139 = vadd.f32 0.0, %v1138
      %1140 = vmatmul.bf16.gmra.mxu0 %v1072
      %v1141 = vpop.f32.mrf.mxu0
      %v1142 = vadd.f32 0.0, %v1141
      %v1143 = vpop.f32.mrf.mxu0
      %v1144 = vadd.f32 0.0, %v1143
      %1145 = vmatmul.bf16.gmra.mxu0 %v1073
      %v1146 = vpop.f32.mrf.mxu0
      %v1147 = vadd.f32 0.0, %v1146
      %v1148 = vpop.f32.mrf.mxu0
      %v1149 = vadd.f32 0.0, %v1148
      %1150 = vmatmul.bf16.gmra.mxu0 %v1074
      %v1151 = vpop.f32.mrf.mxu0
      %v1152 = vadd.f32 0.0, %v1151
      %v1153 = vpop.f32.mrf.mxu0
      %v1154 = vadd.f32 0.0, %v1153
      %1155 = vdwg.mxu0
      %v1156 = vadd.f32 %v1028, %v1137
      %v1157 = vadd.f32 %v1029, %v1139
      %v1158 = vadd.f32 %v1030, %v1142
      %v1159 = vadd.f32 %v1031, %v1144
      %v1160 = vadd.f32 %v1032, %v1147
      %v1161 = vadd.f32 %v1033, %v1149
      %v1162 = vadd.f32 %v1034, %v1152
      %v1163 = vadd.f32 %v1035, %v1154
      %v1164 = vrot.slane %v1037, 5
      %v1165 = vrot.slane %v1164, 4
      %v1166 = vrot.slane %v1038, 5
      %v1167 = vsel %vm773, %v1165, %v1166
      %s1168 = scalar_lea.vmem %s3, 320
      %v1169 = vld [vmem:[%s1168] sm:$0xf]
      %v1170 = vld [vmem:[%s1168 + $0x4] sm:$0xf]
      %v1171 = vld [vmem:[%s1168 + $0x8] sm:$0xf]
      %v1172 = vld [vmem:[%s1168 + $0xc] sm:$0xf]
      %v1173 = vld [vmem:[%s1168 + $0x10] sm:$0xf]
      %v1174 = vld [vmem:[%s1168 + $0x14] sm:$0xf]
      %v1175 = vld [vmem:[%s1168 + $0x18] sm:$0xf]
      %v1176 = vld [vmem:[%s1168 + $0x1c] sm:$0xf]
      %v1177 = vld [vmem:[%s1168 + $0x20] sm:$0xf]
      %v1178 = vld [vmem:[%s1168 + $0x24] sm:$0xf]
      %v1179 = vld [vmem:[%s1168 + $0x28] sm:$0xf]
      %v1180 = vld [vmem:[%s1168 + $0x2c] sm:$0xf]
      %v1181 = vld [vmem:[%s1168 + $0x30] sm:$0xf]
      %v1182 = vld [vmem:[%s1168 + $0x34] sm:$0xf]
      %v1183 = vld [vmem:[%s1168 + $0x38] sm:$0xf]
      %v1184 = vld [vmem:[%s1168 + $0x3c] sm:$0xf]
      %v1185 = vunpack.c.l.b16 %v1167
      %v1186 = vpack.c.b16 %v825, %v824
      %v1187 = vpack.c.b16 %v827, %v826
      %v1188 = vpack.c.b16 %v829, %v828
      %v1189 = vpack.c.b16 %v1185, %v830
      %v1210 = vunpack.c.l.b16 %v1169
      %v1211 = vunpack.c.l.b16 %v1170
      %v1212 = vunpack.c.l.b16 %v1171
      %v1213 = vunpack.c.l.b16 %v1172
      %v1214 = vunpack.c.l.b16 %v1173
      %v1215 = vunpack.c.l.b16 %v1174
      %v1216 = vunpack.c.l.b16 %v1175
      %v1217 = vunpack.c.l.b16 %v1176
      %v1218 = vunpack.c.l.b16 %v1177
      %v1219 = vunpack.c.l.b16 %v1178
      %v1220 = vunpack.c.l.b16 %v1179
      %v1221 = vunpack.c.l.b16 %v1180
      %v1222 = vunpack.c.l.b16 %v1181
      %v1223 = vunpack.c.l.b16 %v1182
      %v1224 = vunpack.c.l.b16 %v1183
      %v1225 = vunpack.c.l.b16 %v1184
      %v1226 = vpack.c.b16 %v1211, %v1210
      %v1227 = vpack.c.b16 %v1213, %v1212
      %v1228 = vpack.c.b16 %v1215, %v1214
      %v1229 = vpack.c.b16 %v1217, %v1216
      %v1230 = vpack.c.b16 %v1219, %v1218
      %v1231 = vpack.c.b16 %v1221, %v1220
      %v1232 = vpack.c.b16 %v1223, %v1222
      %v1233 = vpack.c.b16 %v1225, %v1224
      %1242 = vmatpush.bf16.msra.mxu0 %v1233
      %1243 = vmatpush.bf16.msra.mxu0 %v1232
      %1244 = vmatpush.bf16.msra.mxu0 %v1231
      %1245 = vmatpush.bf16.msra.mxu0 %v1230
      %1246 = vmatpush.bf16.msra.mxu0 %v1229
      %1247 = vmatpush.bf16.msra.mxu0 %v1228
      %1248 = vmatpush.bf16.msra.mxu0 %v1227
      %1249 = vmatpush.bf16.msra.mxu0 %v1226
      %1250 = vmatmul.bf16.gmra.mxu0 %v1186
      %v1251 = vpop.f32.mrf.mxu0
      %v1252 = vadd.f32 0.0, %v1251
      %v1253 = vpop.f32.mrf.mxu0
      %v1254 = vadd.f32 0.0, %v1253
      %1255 = vmatmul.bf16.gmra.mxu0 %v1187
      %v1256 = vpop.f32.mrf.mxu0
      %v1257 = vadd.f32 0.0, %v1256
      %v1258 = vpop.f32.mrf.mxu0
      %v1259 = vadd.f32 0.0, %v1258
      %1260 = vmatmul.bf16.gmra.mxu0 %v1188
      %v1261 = vpop.f32.mrf.mxu0
      %v1262 = vadd.f32 0.0, %v1261
      %v1263 = vpop.f32.mrf.mxu0
      %v1264 = vadd.f32 0.0, %v1263
      %1265 = vmatmul.bf16.gmra.mxu0 %v1189
      %v1266 = vpop.f32.mrf.mxu0
      %v1267 = vadd.f32 0.0, %v1266
      %v1268 = vpop.f32.mrf.mxu0
      %v1269 = vadd.f32 0.0, %v1268
      %1270 = vdwg.mxu0
      %v1271 = vadd.f32 %v1156, %v1252
      %v1272 = vadd.f32 %v1157, %v1254
      %v1273 = vadd.f32 %v1158, %v1257
      %v1274 = vadd.f32 %v1159, %v1259
      %v1275 = vadd.f32 %v1160, %v1262
      %v1276 = vadd.f32 %v1161, %v1264
      %v1277 = vadd.f32 %v1162, %v1267
      %v1278 = vadd.f32 %v1163, %v1269
      %s1279 = scalar_lea.vmem %s3, 384
      %v1280 = vld [vmem:[%s1279] sm:$0xf]
      %v1281 = vld [vmem:[%s1279 + $0x4] sm:$0xf]
      %v1282 = vld [vmem:[%s1279 + $0x8] sm:$0xf]
      %v1283 = vld [vmem:[%s1279 + $0xc] sm:$0xf]
      %v1284 = vld [vmem:[%s1279 + $0x10] sm:$0xf]
      %v1285 = vld [vmem:[%s1279 + $0x14] sm:$0xf]
      %v1286 = vld [vmem:[%s1279 + $0x18] sm:$0xf]
      %v1287 = vld [vmem:[%s1279 + $0x1c] sm:$0xf]
      %v1288 = vld [vmem:[%s1279 + $0x20] sm:$0xf]
      %v1289 = vld [vmem:[%s1279 + $0x24] sm:$0xf]
      %v1290 = vld [vmem:[%s1279 + $0x28] sm:$0xf]
      %v1291 = vld [vmem:[%s1279 + $0x2c] sm:$0xf]
      %v1292 = vld [vmem:[%s1279 + $0x30] sm:$0xf]
      %v1293 = vld [vmem:[%s1279 + $0x34] sm:$0xf]
      %v1294 = vld [vmem:[%s1279 + $0x38] sm:$0xf]
      %v1295 = vld [vmem:[%s1279 + $0x3c] sm:$0xf]
      %v1296 = vpack.c.b16 %v429, %v942
      %v1314 = vunpack.c.l.b16 %v1280
      %v1315 = vunpack.c.l.b16 %v1281
      %v1316 = vunpack.c.l.b16 %v1282
      %v1317 = vunpack.c.l.b16 %v1283
      %v1318 = vunpack.c.l.b16 %v1284
      %v1319 = vunpack.c.l.b16 %v1285
      %v1320 = vunpack.c.l.b16 %v1286
      %v1321 = vunpack.c.l.b16 %v1287
      %v1322 = vunpack.c.l.b16 %v1288
      %v1323 = vunpack.c.l.b16 %v1289
      %v1324 = vunpack.c.l.b16 %v1290
      %v1325 = vunpack.c.l.b16 %v1291
      %v1326 = vunpack.c.l.b16 %v1292
      %v1327 = vunpack.c.l.b16 %v1293
      %v1328 = vunpack.c.l.b16 %v1294
      %v1329 = vunpack.c.l.b16 %v1295
      %v1330 = vpack.c.b16 %v1315, %v1314
      %v1331 = vpack.c.b16 %v1317, %v1316
      %v1332 = vpack.c.b16 %v1319, %v1318
      %v1333 = vpack.c.b16 %v1321, %v1320
      %v1334 = vpack.c.b16 %v1323, %v1322
      %v1335 = vpack.c.b16 %v1325, %v1324
      %v1336 = vpack.c.b16 %v1327, %v1326
      %v1337 = vpack.c.b16 %v1329, %v1328
      %1346 = vmatpush.bf16.msra.mxu0 %v1337
      %1347 = vmatpush.bf16.msra.mxu0 %v1336
      %1348 = vmatpush.bf16.msra.mxu0 %v1335
      %1349 = vmatpush.bf16.msra.mxu0 %v1334
      %1350 = vmatpush.bf16.msra.mxu0 %v1333
      %1351 = vmatpush.bf16.msra.mxu0 %v1332
      %1352 = vmatpush.bf16.msra.mxu0 %v1331
      %1353 = vmatpush.bf16.msra.mxu0 %v1330
      %1354 = vmatmul.bf16.gmra.mxu0 %v687
      %v1355 = vpop.f32.mrf.mxu0
      %v1356 = vadd.f32 0.0, %v1355
      %v1357 = vpop.f32.mrf.mxu0
      %v1358 = vadd.f32 0.0, %v1357
      %1359 = vmatmul.bf16.gmra.mxu0 %v688
      %v1360 = vpop.f32.mrf.mxu0
      %v1361 = vadd.f32 0.0, %v1360
      %v1362 = vpop.f32.mrf.mxu0
      %v1363 = vadd.f32 0.0, %v1362
      %1364 = vmatmul.bf16.gmra.mxu0 %v689
      %v1365 = vpop.f32.mrf.mxu0
      %v1366 = vadd.f32 0.0, %v1365
      %v1367 = vpop.f32.mrf.mxu0
      %v1368 = vadd.f32 0.0, %v1367
      %1369 = vmatmul.bf16.gmra.mxu0 %v1296
      %v1370 = vpop.f32.mrf.mxu0
      %v1371 = vadd.f32 0.0, %v1370
      %v1372 = vpop.f32.mrf.mxu0
      %v1373 = vadd.f32 0.0, %v1372
      %1374 = vdwg.mxu0
      %v1375 = vadd.f32 %v1271, %v1356
      %v1376 = vadd.f32 %v1272, %v1358
      %v1377 = vadd.f32 %v1273, %v1361
      %v1378 = vadd.f32 %v1274, %v1363
      %v1379 = vadd.f32 %v1275, %v1366
      %v1380 = vadd.f32 %v1276, %v1368
      %v1381 = vadd.f32 %v1277, %v1371
      %v1382 = vadd.f32 %v1278, %v1373
      %s1383 = scalar_lea.vmem %s3, 448
      %v1384 = vld [vmem:[%s1383] sm:$0xf]
      %v1385 = vld [vmem:[%s1383 + $0x4] sm:$0xf]
      %v1386 = vld [vmem:[%s1383 + $0x8] sm:$0xf]
      %v1387 = vld [vmem:[%s1383 + $0xc] sm:$0xf]
      %v1388 = vld [vmem:[%s1383 + $0x10] sm:$0xf]
      %v1389 = vld [vmem:[%s1383 + $0x14] sm:$0xf]
      %v1390 = vld [vmem:[%s1383 + $0x18] sm:$0xf]
      %v1391 = vld [vmem:[%s1383 + $0x1c] sm:$0xf]
      %v1392 = vld [vmem:[%s1383 + $0x20] sm:$0xf]
      %v1393 = vld [vmem:[%s1383 + $0x24] sm:$0xf]
      %v1394 = vld [vmem:[%s1383 + $0x28] sm:$0xf]
      %v1395 = vld [vmem:[%s1383 + $0x2c] sm:$0xf]
      %v1396 = vld [vmem:[%s1383 + $0x30] sm:$0xf]
      %v1397 = vld [vmem:[%s1383 + $0x34] sm:$0xf]
      %v1398 = vld [vmem:[%s1383 + $0x38] sm:$0xf]
      %v1399 = vld [vmem:[%s1383 + $0x3c] sm:$0xf]
      %v1400 = vpack.c.b16 %v593, %v1070
      %v1418 = vunpack.c.l.b16 %v1384
      %v1419 = vunpack.c.l.b16 %v1385
      %v1420 = vunpack.c.l.b16 %v1386
      %v1421 = vunpack.c.l.b16 %v1387
      %v1422 = vunpack.c.l.b16 %v1388
      %v1423 = vunpack.c.l.b16 %v1389
      %v1424 = vunpack.c.l.b16 %v1390
      %v1425 = vunpack.c.l.b16 %v1391
      %v1426 = vunpack.c.l.b16 %v1392
      %v1427 = vunpack.c.l.b16 %v1393
      %v1428 = vunpack.c.l.b16 %v1394
      %v1429 = vunpack.c.l.b16 %v1395
      %v1430 = vunpack.c.l.b16 %v1396
      %v1431 = vunpack.c.l.b16 %v1397
      %v1432 = vunpack.c.l.b16 %v1398
      %v1433 = vunpack.c.l.b16 %v1399
      %v1434 = vpack.c.b16 %v1419, %v1418
      %v1435 = vpack.c.b16 %v1421, %v1420
      %v1436 = vpack.c.b16 %v1423, %v1422
      %v1437 = vpack.c.b16 %v1425, %v1424
      %v1438 = vpack.c.b16 %v1427, %v1426
      %v1439 = vpack.c.b16 %v1429, %v1428
      %v1440 = vpack.c.b16 %v1431, %v1430
      %v1441 = vpack.c.b16 %v1433, %v1432
      %1450 = vmatpush.bf16.msra.mxu0 %v1441
      %1451 = vmatpush.bf16.msra.mxu0 %v1440
      %1452 = vmatpush.bf16.msra.mxu0 %v1439
      %1453 = vmatpush.bf16.msra.mxu0 %v1438
      %1454 = vmatpush.bf16.msra.mxu0 %v1437
      %1455 = vmatpush.bf16.msra.mxu0 %v1436
      %1456 = vmatpush.bf16.msra.mxu0 %v1435
      %1457 = vmatpush.bf16.msra.mxu0 %v1434
      %1458 = vmatmul.bf16.gmra.mxu0 %v602
      %v1459 = vpop.f32.mrf.mxu0
      %v1460 = vadd.f32 0.0, %v1459
      %v1461 = vpop.f32.mrf.mxu0
      %v1462 = vadd.f32 0.0, %v1461
      %1463 = vmatmul.bf16.gmra.mxu0 %v603
      %v1464 = vpop.f32.mrf.mxu0
      %v1465 = vadd.f32 0.0, %v1464
      %v1466 = vpop.f32.mrf.mxu0
      %v1467 = vadd.f32 0.0, %v1466
      %1468 = vmatmul.bf16.gmra.mxu0 %v604
      %v1469 = vpop.f32.mrf.mxu0
      %v1470 = vadd.f32 0.0, %v1469
      %v1471 = vpop.f32.mrf.mxu0
      %v1472 = vadd.f32 0.0, %v1471
      %1473 = vmatmul.bf16.gmra.mxu0 %v1400
      %v1474 = vpop.f32.mrf.mxu0
      %v1475 = vadd.f32 0.0, %v1474
      %v1476 = vpop.f32.mrf.mxu0
      %v1477 = vadd.f32 0.0, %v1476
      %1478 = vdwg.mxu0
      %v1479 = vadd.f32 %v1375, %v1460
      %v1480 = vadd.f32 %v1376, %v1462
      %v1481 = vadd.f32 %v1377, %v1465
      %v1482 = vadd.f32 %v1378, %v1467
      %v1483 = vadd.f32 %v1379, %v1470
      %v1484 = vadd.f32 %v1380, %v1472
      %v1485 = vadd.f32 %v1381, %v1475
      %v1486 = vadd.f32 %v1382, %v1477
      %s1487 = scalar_lea.vmem %s3, 512
      %v1488 = vld [vmem:[%s1487] sm:$0xf]
      %v1489 = vld [vmem:[%s1487 + $0x4] sm:$0xf]
      %v1490 = vld [vmem:[%s1487 + $0x8] sm:$0xf]
      %v1491 = vld [vmem:[%s1487 + $0xc] sm:$0xf]
      %v1492 = vld [vmem:[%s1487 + $0x10] sm:$0xf]
      %v1493 = vld [vmem:[%s1487 + $0x14] sm:$0xf]
      %v1494 = vld [vmem:[%s1487 + $0x18] sm:$0xf]
      %v1495 = vld [vmem:[%s1487 + $0x1c] sm:$0xf]
      %v1496 = vld [vmem:[%s1487 + $0x20] sm:$0xf]
      %v1497 = vld [vmem:[%s1487 + $0x24] sm:$0xf]
      %v1498 = vld [vmem:[%s1487 + $0x28] sm:$0xf]
      %v1499 = vld [vmem:[%s1487 + $0x2c] sm:$0xf]
      %v1500 = vld [vmem:[%s1487 + $0x30] sm:$0xf]
      %v1501 = vld [vmem:[%s1487 + $0x34] sm:$0xf]
      %v1502 = vld [vmem:[%s1487 + $0x38] sm:$0xf]
      %v1503 = vld [vmem:[%s1487 + $0x3c] sm:$0xf]
      %v1504 = vpack.c.b16 %v823, %v1185
      %v1522 = vunpack.c.l.b16 %v1488
      %v1523 = vunpack.c.l.b16 %v1489
      %v1524 = vunpack.c.l.b16 %v1490
      %v1525 = vunpack.c.l.b16 %v1491
      %v1526 = vunpack.c.l.b16 %v1492
      %v1527 = vunpack.c.l.b16 %v1493
      %v1528 = vunpack.c.l.b16 %v1494
      %v1529 = vunpack.c.l.b16 %v1495
      %v1530 = vunpack.c.l.b16 %v1496
      %v1531 = vunpack.c.l.b16 %v1497
      %v1532 = vunpack.c.l.b16 %v1498
      %v1533 = vunpack.c.l.b16 %v1499
      %v1534 = vunpack.c.l.b16 %v1500
      %v1535 = vunpack.c.l.b16 %v1501
      %v1536 = vunpack.c.l.b16 %v1502
      %v1537 = vunpack.c.l.b16 %v1503
      %v1538 = vpack.c.b16 %v1523, %v1522
      %v1539 = vpack.c.b16 %v1525, %v1524
      %v1540 = vpack.c.b16 %v1527, %v1526
      %v1541 = vpack.c.b16 %v1529, %v1528
      %v1542 = vpack.c.b16 %v1531, %v1530
      %v1543 = vpack.c.b16 %v1533, %v1532
      %v1544 = vpack.c.b16 %v1535, %v1534
      %v1545 = vpack.c.b16 %v1537, %v1536
      %1554 = vmatpush.bf16.msra.mxu0 %v1545
      %1555 = vmatpush.bf16.msra.mxu0 %v1544
      %1556 = vmatpush.bf16.msra.mxu0 %v1543
      %1557 = vmatpush.bf16.msra.mxu0 %v1542
      %1558 = vmatpush.bf16.msra.mxu0 %v1541
      %1559 = vmatpush.bf16.msra.mxu0 %v1540
      %1560 = vmatpush.bf16.msra.mxu0 %v1539
      %1561 = vmatpush.bf16.msra.mxu0 %v1538
      %1562 = vmatmul.bf16.gmra.mxu0 %v832
      %v1563 = vpop.f32.mrf.mxu0
      %v1564 = vadd.f32 0.0, %v1563
      %v1565 = vpop.f32.mrf.mxu0
      %v1566 = vadd.f32 0.0, %v1565
      %1567 = vmatmul.bf16.gmra.mxu0 %v833
      %v1568 = vpop.f32.mrf.mxu0
      %v1569 = vadd.f32 0.0, %v1568
      %v1570 = vpop.f32.mrf.mxu0
      %v1571 = vadd.f32 0.0, %v1570
      %1572 = vmatmul.bf16.gmra.mxu0 %v834
      %v1573 = vpop.f32.mrf.mxu0
      %v1574 = vadd.f32 0.0, %v1573
      %v1575 = vpop.f32.mrf.mxu0
      %v1576 = vadd.f32 0.0, %v1575
      %1577 = vmatmul.bf16.gmra.mxu0 %v1504
      %v1578 = vpop.f32.mrf.mxu0
      %v1579 = vadd.f32 0.0, %v1578
      %v1580 = vpop.f32.mrf.mxu0
      %v1581 = vadd.f32 0.0, %v1580
      %1582 = vdwg.mxu0
      %v1583 = vadd.f32 %v1479, %v1564
      %v1584 = vadd.f32 %v1480, %v1566
      %v1585 = vadd.f32 %v1481, %v1569
      %v1586 = vadd.f32 %v1482, %v1571
      %v1587 = vadd.f32 %v1483, %v1574
      %v1588 = vadd.f32 %v1484, %v1576
      %v1589 = vadd.f32 %v1485, %v1579
      %v1590 = vadd.f32 %v1486, %v1581
      %v1591 = vpack.c.bf16 %v1583, %v1583
      %v1592 = vpack.c.bf16 %v1584, %v1584
      %v1593 = vpack.c.bf16 %v1585, %v1585
      %v1594 = vpack.c.bf16 %v1586, %v1586
      %v1595 = vpack.c.bf16 %v1587, %v1587
      %v1596 = vpack.c.bf16 %v1588, %v1588
      %v1597 = vpack.c.bf16 %v1589, %v1589
      %v1598 = vpack.c.bf16 %v1590, %v1590
      %1599 = vst [vmem:[%s231] sm:$0xf] %v1591
      %1600 = vst [vmem:[%s231 + $0x4] sm:$0xf] %v1592
      %1601 = vst [vmem:[%s231 + $0x8] sm:$0xf] %v1593
      %1602 = vst [vmem:[%s231 + $0xc] sm:$0xf] %v1594
      %1603 = vst [vmem:[%s231 + $0x10] sm:$0xf] %v1595
      %1604 = vst [vmem:[%s231 + $0x14] sm:$0xf] %v1596
      %1605 = vst [vmem:[%s231 + $0x18] sm:$0xf] %v1597
      %1606 = vst [vmem:[%s231 + $0x1c] sm:$0xf] %v1598
      %v1607 = vadd.f32 %v1583, %v1584
      %v1608 = vadd.f32 %v1607, %v1585
      %v1609 = vadd.f32 %v1608, %v1586
      %v1610 = vadd.f32 %v1609, %v1587
      %v1611 = vadd.f32 %v1610, %v1588
      %v1612 = vadd.f32 %v1611, %v1589
      %v1613 = vadd.f32 %v1612, %v1590
      %v1614 = vrot.slane %v1613, 4
      %v1615 = vadd.f32 %v1613, %v1614
      %v1616 = vrot.slane %v1615, 2
      %v1617 = vadd.f32 %v1615, %v1616
      %v1618 = vrot.slane %v1617, 1
      %v1619 = vadd.f32 %v1617, %v1618
      %v1620 = vmul.f32 %v1619, 0.015625
      %v1621 = vsub.f32 %v1583, %v1620
      %v1622 = vsub.f32 %v1584, %v1620
      %v1623 = vsub.f32 %v1585, %v1620
      %v1624 = vsub.f32 %v1586, %v1620
      %v1625 = vsub.f32 %v1587, %v1620
      %v1626 = vsub.f32 %v1588, %v1620
      %v1627 = vsub.f32 %v1589, %v1620
      %v1628 = vsub.f32 %v1590, %v1620
      %1629 = vst [vmem:[%s235] sm:$0x1] %v1619
      %v1630 = vmul.f32 %v1621, %v1621
      %v1631 = vmul.f32 %v1622, %v1622
      %v1632 = vmul.f32 %v1623, %v1623
      %v1633 = vmul.f32 %v1624, %v1624
      %v1634 = vmul.f32 %v1625, %v1625
      %v1635 = vmul.f32 %v1626, %v1626
      %v1636 = vmul.f32 %v1627, %v1627
      %v1637 = vmul.f32 %v1628, %v1628
      %v1638 = vadd.f32 %v1630, %v1631
      %v1639 = vadd.f32 %v1638, %v1632
      %v1640 = vadd.f32 %v1639, %v1633
      %v1641 = vadd.f32 %v1640, %v1634
      %v1642 = vadd.f32 %v1641, %v1635
      %v1643 = vadd.f32 %v1642, %v1636
      %v1644 = vadd.f32 %v1643, %v1637
      %v1645 = vrot.slane %v1644, 4
      %v1646 = vadd.f32 %v1644, %v1645
      %v1647 = vrot.slane %v1646, 2
      %v1648 = vadd.f32 %v1646, %v1647
      %v1649 = vrot.slane %v1648, 1
      %v1650 = vadd.f32 %v1648, %v1649
      %1651 = vst [vmem:[%s235 + $0x1] sm:$0x1] %v1650
      %1652 = vst [vmem:[%s235 + $0x2] sm:$0x3f] 0.0
      %p1653 = scmp.lt.s32.totalorder %s17, 1
      %s1654 = scalar_select %p1653, %s17, 1
      %s1655 = smul.addr %s1654, 8
      %s1656 = smul.addr %s1655, 4
      %s1657 = scalar_lea.vmem %s4, %s1656
      %p1658 = scmp.lt.s32.totalorder %s17, 1
      %s1659 = scalar_select %p1658, %s17, 1
      %s1660 = smul.addr %s1659, 8
      %s1661 = scalar_lea.vmem %s5, %s1660
      // Predicated region
      $region37: #{_lambda_.4} parent=35 // pred_check
        %p1662 = pneg %p124
      $region38: #{_lambda_.4} parent=35 // pred_check_branch
        %1664 = sbr.rel (%p1662) target = $region40
      $region39: #{_lambda_.4} parent=35 // pred_region
        _
      $region40: #{_lambda_.4} parent=35 // pred_fallthru
        _
      // Predicated region
      $region41: #{_lambda_.4} parent=35 // pred_check
        %p1665 = pneg %p150
      $region42: #{_lambda_.4} parent=35 // pred_check_branch
        %1667 = sbr.rel (%p1665) target = $region44
      $region43: #{_lambda_.4} parent=35 // pred_region
        _
      $region44: #{_lambda_.4} parent=35 // pred_fallthru
        _
    $region36: #{_lambda_.4} parent=5 // pred_fallthru
      _
    %p1668 = scmp.le.s32.totalorder 2, %s12
    // Predicated region
    $region45: #{_lambda_.4} parent=5 // pred_check
      %p1669 = pneg %p1668
    $region46: #{_lambda_.4} parent=5 // pred_check_branch
      %1671 = sbr.rel (%p1669) target = $region48
    $region47: #{_lambda_.4} parent=5 // pred_region
      %s1672 = ssub.s32 %s12, 2
      // Predicated region
      $region49: #{_lambda_.4} parent=47 // pred_check
        %p1673 = pneg %p130
      $region50: #{_lambda_.4} parent=47 // pred_check_branch
        %1675 = sbr.rel (%p1673) target = $region52
      $region51: #{_lambda_.4} parent=47 // pred_region
        %p1676 = scmp.lt.s32.totalorder %s18, 1
        %s1677 = scalar_select %p1676, %s18, 1
        %s1678 = smul.addr %s1677, 8
        %s1679 = smul.addr %s1678, 4
        %s1680 = scalar_lea.vmem %s4, %s1679
      $region52: #{_lambda_.4} parent=47 // pred_fallthru
        _
      // Predicated region
      $region53: #{_lambda_.4} parent=47 // pred_check
        %p1681 = pneg %p156
      $region54: #{_lambda_.4} parent=47 // pred_check_branch
        %1683 = sbr.rel (%p1681) target = $region56
      $region55: #{_lambda_.4} parent=47 // pred_region
        %p1684 = scmp.lt.s32.totalorder %s18, 1
        %s1685 = scalar_select %p1684, %s18, 1
        %s1686 = smul.addr %s1685, 8
        %s1687 = scalar_lea.vmem %s5, %s1686
      $region56: #{_lambda_.4} parent=47 // pred_fallthru
        _
    $region48: #{_lambda_.4} parent=5 // pred_fallthru
      _
  $region6: #{_lambda_.4} parent=0 // loop_footer
    %s16 = sadd.s32 1, %s12
  $region7: #{_lambda_.4} parent=0 // loop_footer_branch
    %11 = sbr.rel target = $region3
  $region8: #{_lambda_.4} parent=0 // loop_exit
    _

</llo_original>
